<compile_context>
chip_gen: v7x
topology: tpu7x:2x2x1
jax: 0.10.0
libtpu: 0.0.40
codegen_flags: <defaults>
</compile_context>

<pallas_src>
import functools

import jax
import jax.numpy as jnp
from jax.experimental import pallas as pl
from jax.experimental.pallas import tpu as pltpu

_NEG_INF = -1e30  # finite "minus infinity": avoids inf-inf NaNs, exp() underflows to 0


def _lm_head_ce_kernel(h_ref, w_ref, b_ref, lbl_ref, out_ref, m_sc, l_sc, c_sc, *, tv):
    """One (token-tile, vocab-tile) grid step.

    h_ref:   (TM, H)  bf16  hidden states for this token tile
    w_ref:   (H, TV)  bf16  LM-head weight slab for this vocab tile
    b_ref:   (1, TV)  f32   LM-head bias slab (padded vocab lanes hold -1e30)
    lbl_ref: (TM, 1)  i32   shifted labels (-100 = ignore_index)
    out_ref: (TM, 1)  f32   per-token CE loss (written on the last vocab tile)
    m_sc/l_sc/c_sc: (TM, 1) f32 running max / sum-exp / correct-logit accumulators
    """
    j = pl.program_id(1)

    @pl.when(j == 0)
    def _init():
        m_sc[...] = jnp.full_like(m_sc, _NEG_INF)
        l_sc[...] = jnp.zeros_like(l_sc)
        c_sc[...] = jnp.zeros_like(c_sc)

    # LM head for this vocab tile: bf16 operands, f32 accumulation on the MXU.
    logits = jnp.dot(h_ref[...], w_ref[...],
                     preferred_element_type=jnp.float32) + b_ref[...]          # (TM, TV)

    # Online log-sum-exp accumulation across vocab tiles (flash-CE).
    m_prev = m_sc[...]
    m_new = jnp.maximum(m_prev, jnp.max(logits, axis=-1, keepdims=True))
    alpha = jnp.exp(m_prev - m_new)
    p = jnp.exp(logits - m_new)
    l_sc[...] = alpha * l_sc[...] + jnp.sum(p, axis=-1, keepdims=True)
    m_sc[...] = m_new

    # Correct-class logit gather for this vocab tile via one-hot compare.
    # At most one vocab tile contains the label; ignore_index (-100) never matches;
    # padded vocab lanes have indices >= V and never match either.
    labels = lbl_ref[...]                                                       # (TM, 1)
    vocab_ids = jax.lax.broadcasted_iota(jnp.int32, logits.shape, 1) + j * tv
    c_sc[...] += jnp.sum(jnp.where(vocab_ids == labels, logits, 0.0),
                         axis=-1, keepdims=True)

    @pl.when(j == pl.num_programs(1) - 1)
    def _finalize():
        lse = m_sc[...] + jnp.log(l_sc[...])
        out_ref[...] = jnp.where(labels != jnp.int32(-100), lse - c_sc[...], 0.0)


def prompt_for_generation_loss(input_ids, loss_ids, embedding, w_lm, b_lm,
                               *, tm=128, tv=256):
    """Computes the PromptForGeneration._forward loss (scalar)."""
    B, S = input_ids.shape
    H = embedding.shape[1]
    V = w_lm.shape[1]

    # --- glue: synthetic PLM backbone = embedding lookup; bf16 matmul operands ---
    hidden = embedding[input_ids].reshape(B * S, H).astype(jnp.bfloat16)        # (N, H)

    # --- glue: merged shifted labels: label[t] = ids[t+1] if loss_ids[t+1] > 0 else -100;
    #     last position padded -100 (== dropping logits[:, -1] in the shifted CE) ---
    shifted = jnp.where(loss_ids[:, 1:] > 0, input_ids[:, 1:], -100)
    labels = jnp.concatenate([shifted, jnp.full((B, 1), -100, shifted.dtype)], axis=1)
    labels = labels.reshape(B * S, 1).astype(jnp.int32)                          # (N, 1)

    # --- glue: pad the token axis to TM and the vocab axis to TV ---
    N = B * S
    n_pad = -N % tm
    v_pad = -V % tv
    if n_pad:
        hidden = jnp.pad(hidden, ((0, n_pad), (0, 0)))
        labels = jnp.pad(labels, ((0, n_pad), (0, 0)), constant_values=-100)
    w = w_lm.astype(jnp.bfloat16)
    bias = b_lm.reshape(1, V).astype(jnp.float32)
    if v_pad:
        w = jnp.pad(w, ((0, 0), (0, v_pad)))
        bias = jnp.pad(bias, ((0, 0), (0, v_pad)), constant_values=_NEG_INF)

    n_tok_tiles = (N + n_pad) // tm
    n_voc_tiles = (V + v_pad) // tv

    per_tok = pl.pallas_call(
        functools.partial(_lm_head_ce_kernel, tv=tv),
        out_shape=jax.ShapeDtypeStruct((N + n_pad, 1), jnp.float32),
        grid_spec=pltpu.PrefetchScalarGridSpec(
            num_scalar_prefetch=0,
            grid=(n_tok_tiles, n_voc_tiles),
            in_specs=[
                pl.BlockSpec((tm, H), lambda i, j: (i, 0)),   # hidden token tile
                pl.BlockSpec((H, tv), lambda i, j: (0, j)),   # W vocab slab
                pl.BlockSpec((1, tv), lambda i, j: (0, j)),   # bias vocab slab
                pl.BlockSpec((tm, 1), lambda i, j: (i, 0)),   # shifted labels
            ],
            out_specs=pl.BlockSpec((tm, 1), lambda i, j: (i, 0)),
            scratch_shapes=[pltpu.VMEM((tm, 1), jnp.float32)] * 3,
        ),
        compiler_params=pltpu.CompilerParams(
            dimension_semantics=("parallel", "arbitrary")),
    )(hidden, w, bias, labels)                                                   # (N_pad, 1)

    # loss.view(B, -1).sum(-1).mean()  ==  sum(all per-token losses) / B  (padding adds 0)
    return jnp.sum(per_tok) / B


def reference_loss(input_ids, loss_ids, embedding, w_lm, b_lm):
    """Pure-JAX (f32) reference mirroring the PyTorch semantics exactly."""
    hidden = embedding[input_ids].astype(jnp.float32)
    logits = jnp.einsum("bsh,hv->bsv", hidden, w_lm) + b_lm
    shift_logits = logits[:, :-1, :]
    shift_labels = jnp.where(loss_ids[:, 1:] > 0, input_ids[:, 1:], -100)
    lse = jax.nn.logsumexp(shift_logits, axis=-1)
    safe_labels = jnp.where(shift_labels == -100, 0, shift_labels)
    picked = jnp.take_along_axis(shift_logits, safe_labels[..., None], axis=-1)[..., 0]
    per_tok = jnp.where(shift_labels == -100, 0.0, lse - picked)
    return jnp.mean(jnp.sum(per_tok, axis=-1))


if __name__ == "__main__":
    # Small shapes; V deliberately not a multiple of the vocab tile and B*S < TM so
    # both padding paths are exercised.
    B, S, H, V = 2, 16, 128, 1000

    key = jax.random.PRNGKey(0)
    k_emb, k_w, k_b, k_ids = jax.random.split(key, 4)

    embedding = jax.random.normal(k_emb, (V, H), jnp.float32) * 0.02
    w_lm = jax.random.normal(k_w, (H, V), jnp.float32) * 0.02
    b_lm = jax.random.normal(k_b, (V,), jnp.float32) * 0.01

    input_ids = jax.random.randint(k_ids, (B, S), 0, V, jnp.int32)
    # loss positions: second half of the sequence (prompt/completion split)
    loss_ids = (jnp.arange(S)[None, :] >= S // 2).astype(jnp.int32) * jnp.ones((B, 1), jnp.int32)

    loss = prompt_for_generation_loss(input_ids, loss_ids, embedding, w_lm, b_lm)
    loss = jax.block_until_ready(loss)

    ref = reference_loss(input_ids, loss_ids, embedding, w_lm, b_lm)
    assert jnp.allclose(loss, ref, rtol=5e-3, atol=5e-3), (loss, ref)

    print("KERNEL_OK")
</pallas_src>

<mosaic_0001>
module attributes {stable_mosaic.version = 11 : i64} {
  func.func @_lm_head_ce_kernel(%arg0: i32, %arg1: i32, %arg2: memref<128x128xbf16, #tpu.memory_space<vmem>>, %arg3: memref<128x256xbf16, #tpu.memory_space<vmem>>, %arg4: memref<1x256xf32, #tpu.memory_space<vmem>>, %arg5: memref<128x1xi32, #tpu.memory_space<vmem>>, %arg6: memref<128x1xf32, #tpu.memory_space<vmem>>, %arg7: memref<128x1xf32, #tpu.memory_space<vmem>>, %arg8: memref<128x1xf32, #tpu.memory_space<vmem>>, %arg9: memref<128x1xf32, #tpu.memory_space<vmem>>) attributes {dimension_semantics = [#tpu.dimension_semantics<parallel>, #tpu.dimension_semantics<arbitrary>], iteration_bounds = array<i64: 1, 4>, scalar_prefetch = 0 : i64, scratch_operands = 3 : i64, tpu.core_type = #tpu.core_type<tc>, window_params = [{transform_indices = @transform_0, window_bounds = array<i64: 128, 128>}, {transform_indices = @transform_1, window_bounds = array<i64: 128, 256>}, {transform_indices = @transform_2, window_bounds = array<i64: 1, 256>}, {transform_indices = @transform_3, window_bounds = array<i64: 128, 1>}, {transform_indices = @transform_4, window_bounds = array<i64: 128, 1>}]} {
    %c0_i32 = arith.constant 0 : i32
    %0 = arith.cmpi eq, %arg1, %c0_i32 : i32
    %1 = arith.extui %0 : i1 to i32
    %c0_i32_0 = arith.constant 0 : i32
    %2 = arith.cmpi ne, %1, %c0_i32_0 : i32
    scf.if %2 {
      %cst_25 = arith.constant -1.000000e+30 : f32
      %42 = vector.broadcast %cst_25 : f32 to vector<128x1xf32>
      %c0_26 = arith.constant 0 : index
      %c0_27 = arith.constant 0 : index
      %43 = vector.load %arg7[%c0_26, %c0_27] : memref<128x1xf32, #tpu.memory_space<vmem>>, vector<128x1xf32>
      tpu.vector_store %arg7[%c0_26, %c0_27], %42 {strides = array<i32>} : memref<128x1xf32, #tpu.memory_space<vmem>>, vector<128x1xf32>,
      %cst_28 = arith.constant 0.000000e+00 : f32
      %44 = vector.broadcast %cst_28 : f32 to vector<128x1xf32>
      %c0_29 = arith.constant 0 : index
      %c0_30 = arith.constant 0 : index
      %45 = vector.load %arg8[%c0_29, %c0_30] : memref<128x1xf32, #tpu.memory_space<vmem>>, vector<128x1xf32>
      tpu.vector_store %arg8[%c0_29, %c0_30], %44 {strides = array<i32>} : memref<128x1xf32, #tpu.memory_space<vmem>>, vector<128x1xf32>,
      %cst_31 = arith.constant 0.000000e+00 : f32
      %46 = vector.broadcast %cst_31 : f32 to vector<128x1xf32>
      %c0_32 = arith.constant 0 : index
      %c0_33 = arith.constant 0 : index
      %47 = vector.load %arg9[%c0_32, %c0_33] : memref<128x1xf32, #tpu.memory_space<vmem>>, vector<128x1xf32>
      tpu.vector_store %arg9[%c0_32, %c0_33], %46 {strides = array<i32>} : memref<128x1xf32, #tpu.memory_space<vmem>>, vector<128x1xf32>,
    } else {
    }
    %c0 = arith.constant 0 : index
    %c0_1 = arith.constant 0 : index
    %3 = vector.load %arg2[%c0, %c0_1] : memref<128x128xbf16, #tpu.memory_space<vmem>>, vector<128x128xbf16>
    %c0_2 = arith.constant 0 : index
    %c0_3 = arith.constant 0 : index
    %4 = vector.load %arg3[%c0_2, %c0_3] : memref<128x256xbf16, #tpu.memory_space<vmem>>, vector<128x256xbf16>
    %cst = arith.constant dense<0.000000e+00> : vector<128x256xf32>
    %5 = tpu.matmul %3, %4, %cst {dimension_numbers = #tpu.dot_dimension_numbers<[1], [0], [0], [1], [0, 0, 1, 1], [], []>} : vector<128x128xbf16>, vector<128x256xbf16>, vector<128x256xf32> -> vector<128x256xf32>
    %c0_4 = arith.constant 0 : index
    %c0_5 = arith.constant 0 : index
    %6 = vector.load %arg4[%c0_4, %c0_5] : memref<1x256xf32, #tpu.memory_space<vmem>>, vector<1x256xf32>
    %7 = vector.broadcast %6 : vector<1x256xf32> to vector<128x256xf32>
    %8 = arith.addf %5, %7 : vector<128x256xf32>
    %c0_6 = arith.constant 0 : index
    %c0_7 = arith.constant 0 : index
    %9 = vector.load %arg7[%c0_6, %c0_7] : memref<128x1xf32, #tpu.memory_space<vmem>>, vector<128x1xf32>
    %cst_8 = arith.constant dense<0xFF800000> : vector<128xf32>
    %10 = vector.multi_reduction <maximumf>, %8, %cst_8 [1] : vector<128x256xf32> to vector<128xf32>
    %11 = vector.shape_cast %10 : vector<128xf32> to vector<128x1xf32>
    %12 = arith.maximumf %9, %11 : vector<128x1xf32>
    %13 = arith.subf %9, %12 : vector<128x1xf32>
    %14 = math.exp %13 : vector<128x1xf32>
    %15 = vector.broadcast %12 : vector<128x1xf32> to vector<128x256xf32>
    %16 = arith.subf %8, %15 : vector<128x256xf32>
    %17 = math.exp %16 : vector<128x256xf32>
    %c0_9 = arith.constant 0 : index
    %c0_10 = arith.constant 0 : index
    %18 = vector.load %arg8[%c0_9, %c0_10] : memref<128x1xf32, #tpu.memory_space<vmem>>, vector<128x1xf32>
    %19 = arith.mulf %14, %18 : vector<128x1xf32>
    %cst_11 = arith.constant dense<0.000000e+00> : vector<128xf32>
    %20 = vector.multi_reduction <add>, %17, %cst_11 [1] : vector<128x256xf32> to vector<128xf32>
    %21 = vector.shape_cast %20 : vector<128xf32> to vector<128x1xf32>
    %22 = arith.addf %19, %21 : vector<128x1xf32>
    %c0_12 = arith.constant 0 : index
    %c0_13 = arith.constant 0 : index
    %23 = vector.load %arg8[%c0_12, %c0_13] : memref<128x1xf32, #tpu.memory_space<vmem>>, vector<128x1xf32>
    tpu.vector_store %arg8[%c0_12, %c0_13], %22 {strides = array<i32>} : memref<128x1xf32, #tpu.memory_space<vmem>>, vector<128x1xf32>,
    %c0_14 = arith.constant 0 : index
    %c0_15 = arith.constant 0 : index
    %24 = vector.load %arg7[%c0_14, %c0_15] : memref<128x1xf32, #tpu.memory_space<vmem>>, vector<128x1xf32>
    tpu.vector_store %arg7[%c0_14, %c0_15], %12 {strides = array<i32>} : memref<128x1xf32, #tpu.memory_space<vmem>>, vector<128x1xf32>,
    %c0_16 = arith.constant 0 : index
    %c0_17 = arith.constant 0 : index
    %25 = vector.load %arg5[%c0_16, %c0_17] : memref<128x1xi32, #tpu.memory_space<vmem>>, vector<128x1xi32>
    %26 = tpu.iota {dimensions = array<i32: 1>} : vector<128x256xi32>
    %c256_i32 = arith.constant 256 : i32
    %27 = arith.muli %arg1, %c256_i32 : i32
    %28 = vector.broadcast %27 : i32 to vector<128x256xi32>
    %29 = arith.addi %26, %28 : vector<128x256xi32>
    %c0_18 = arith.constant 0 : index
    %c0_19 = arith.constant 0 : index
    %30 = vector.load %arg9[%c0_18, %c0_19] : memref<128x1xf32, #tpu.memory_space<vmem>>, vector<128x1xf32>
    %31 = vector.broadcast %25 : vector<128x1xi32> to vector<128x256xi32>
    %32 = arith.cmpi eq, %29, %31 : vector<128x256xi32>
    %cst_20 = arith.constant 0.000000e+00 : f32
    %33 = vector.broadcast %cst_20 : f32 to vector<128x256xf32>
    %34 = arith.select %32, %8, %33 : vector<128x256xi1>, vector<128x256xf32>
    %cst_21 = arith.constant dense<0.000000e+00> : vector<128xf32>
    %35 = vector.multi_reduction <add>, %34, %cst_21 [1] : vector<128x256xf32> to vector<128xf32>
    %36 = vector.shape_cast %35 : vector<128xf32> to vector<128x1xf32>
    %37 = arith.addf %30, %36 : vector<128x1xf32>
    %c0_22 = arith.constant 0 : index
    %c0_23 = arith.constant 0 : index
    %38 = vector.load %arg9[%c0_22, %c0_23] : memref<128x1xf32, #tpu.memory_space<vmem>>, vector<128x1xf32>
    tpu.vector_store %arg9[%c0_22, %c0_23], %37 {strides = array<i32>} : memref<128x1xf32, #tpu.memory_space<vmem>>, vector<128x1xf32>,
    %c3_i32 = arith.constant 3 : i32
    %39 = arith.cmpi eq, %arg1, %c3_i32 : i32
    %40 = arith.extui %39 : i1 to i32
    %c0_i32_24 = arith.constant 0 : i32
    %41 = arith.cmpi ne, %40, %c0_i32_24 : i32
    scf.if %41 {
      %c0_25 = arith.constant 0 : index
      %c0_26 = arith.constant 0 : index
      %42 = vector.load %arg7[%c0_25, %c0_26] : memref<128x1xf32, #tpu.memory_space<vmem>>, vector<128x1xf32>
      %c0_27 = arith.constant 0 : index
      %c0_28 = arith.constant 0 : index
      %43 = vector.load %arg8[%c0_27, %c0_28] : memref<128x1xf32, #tpu.memory_space<vmem>>, vector<128x1xf32>
      %44 = math.log %43 : vector<128x1xf32>
      %45 = arith.addf %42, %44 : vector<128x1xf32>
      %c-100_i32 = arith.constant -100 : i32
      %46 = vector.broadcast %c-100_i32 : i32 to vector<128x1xi32>
      %47 = arith.cmpi ne, %25, %46 : vector<128x1xi32>
      %c0_29 = arith.constant 0 : index
      %c0_30 = arith.constant 0 : index
      %48 = vector.load %arg9[%c0_29, %c0_30] : memref<128x1xf32, #tpu.memory_space<vmem>>, vector<128x1xf32>
      %49 = arith.subf %45, %48 : vector<128x1xf32>
      %cst_31 = arith.constant 0.000000e+00 : f32
      %50 = vector.broadcast %cst_31 : f32 to vector<128x1xf32>
      %51 = arith.select %47, %49, %50 : vector<128x1xi1>, vector<128x1xf32>
      %c0_32 = arith.constant 0 : index
      %c0_33 = arith.constant 0 : index
      %52 = vector.load %arg6[%c0_32, %c0_33] : memref<128x1xf32, #tpu.memory_space<vmem>>, vector<128x1xf32>
      tpu.vector_store %arg6[%c0_32, %c0_33], %51 {strides = array<i32>} : memref<128x1xf32, #tpu.memory_space<vmem>>, vector<128x1xf32>,
    } else {
    }
    return
  }
  func.func @transform_0(%arg0: i32, %arg1: i32) -> (i32, i32) {
    %c0_i32 = arith.constant 0 : i32
    %c0_i32_0 = arith.constant 0 : i32
    return %arg0, %c0_i32 : i32, i32
  }
  func.func @transform_1(%arg0: i32, %arg1: i32) -> (i32, i32) {
    %c0_i32 = arith.constant 0 : i32
    %c0_i32_0 = arith.constant 0 : i32
    return %c0_i32, %arg1 : i32, i32
  }
  func.func @transform_2(%arg0: i32, %arg1: i32) -> (i32, i32) {
    %c0_i32 = arith.constant 0 : i32
    %c0_i32_0 = arith.constant 0 : i32
    return %c0_i32, %arg1 : i32, i32
  }
  func.func @transform_3(%arg0: i32, %arg1: i32) -> (i32, i32) {
    %c0_i32 = arith.constant 0 : i32
    %c0_i32_0 = arith.constant 0 : i32
    return %arg0, %c0_i32 : i32, i32
  }
  func.func @transform_4(%arg0: i32, %arg1: i32) -> (i32, i32) {
    %c0_i32 = arith.constant 0 : i32
    %c0_i32_0 = arith.constant 0 : i32
    return %arg0, %c0_i32 : i32, i32
  }
}

</mosaic_0001>

<llo_original>
// kernel: tpu_custom_call.1
$region0: #{tpu_custom_call.1}
  #allocation0 [shape = 'u32[]', space=smem, size = 0x4, offset = 0x4, fixed_abs, tag = 'smem constant byte address 0x4 - core index']
  #allocation1 [shape = 'u32[144,128]{1,0:T(1,128)}', space=vmem, size = 0x12000, scoped, tag = 'internal scratch']
  #allocation2 [shape = 'f32[128,1]{1,0:T(8,128)}', space=vmem, size = 0x10000, scoped, tag = 'scratch operand']
  #allocation3 [shape = 'f32[128,1]{1,0:T(8,128)}', space=vmem, size = 0x10000, scoped, tag = 'scratch operand']
  #allocation4 [shape = 'f32[128,1]{1,0:T(8,128)}', space=vmem, size = 0x10000, scoped, tag = 'scratch operand']
  %s0 = inlined_call_operand.vmem [shape: bf16[128,128], index: 0, kind: input, shape index: {}]
  %s1 = inlined_call_operand.hbm [shape: bf16[128,1024], index: 1, kind: input, shape index: {}]
  %s2 = inlined_call_operand.vmem [shape: f32[1,1024], index: 2, kind: input, shape index: {}]
  %s3 = inlined_call_operand.vmem [shape: s32[128,1], index: 3, kind: input, shape index: {}]
  %s4 = inlined_call_operand.vmem [shape: f32[128,1], index: 4, kind: output, shape index: {}]
  %s5 = sld [smem:[#allocation0]]
  $region61: #{tpu_custom_call.1} parent=0
    _
  %s7 = ssub.s32 1, %s5
  %s8 = scalar_select 0, %s7, %s5
  $region1: #{tpu_custom_call.1} parent=0
    #allocation5 [shape = 'u8[131072]{0}', space=vmem, size = 0x20000, scoped, tag = 'input window, operand 1']
    #allocation6 [shape = 's32[2]{0}', space=sflag, size = 0x8, scoped, tag = 'scoped memory for tpu_custom_call.1']
    %9 = vsyncpa [#allocation6], 0
    %s10 = scalar_lea.sflag [#allocation6], 1
    %11 = vsyncpa %s10, 0
    loop: start=0, step=1, limit=6
    $region2: #{tpu_custom_call.1} parent=1 // loop_pre_header
      _
    $region3: #{tpu_custom_call.1} parent=1 // loop_header
      %s13 = sphi 0, %s17
      %p14 = scmp.ge.s32.totalorder %s13, 6
      %s20 = sphi 0, %s32
      %s21 = sphi 0, %s28
      %s22 = sphi 0, %s20
      %s23 = sphi 0, %s21
      %s24 = sphi 0, %s22
      %s25 = sphi 0, %s23
      %s35 = sphi 0, %s37
      %s38 = sphi 0, %s35
      %s39 = sphi 0, %s38
      %s55 = sphi 0, %s39
      %s61 = sphi 0, %s63
      %s64 = sphi 0, %s61
      %s65 = sphi 0, %s64
      %s81 = sphi 0, %s65
      %s87 = sphi 0, %s89
      %s90 = sphi 0, %s87
      %s91 = sphi 0, %s90
      %s107 = sphi 0, %s91
      %s113 = sphi 0, %s115
      %s116 = sphi 0, %s113
      %s117 = sphi 0, %s116
      %s133 = sphi 0, %s117
      %s139 = sphi 0, %s141
      %s142 = sphi 0, %s139
      %s143 = sphi 0, %s142
      %s159 = sphi 0, %s143
    $region4: #{tpu_custom_call.1} parent=1 // loop_header_branch
      %16 = sbr.rel (%p14) target = $region8
    $region5: #{tpu_custom_call.1} parent=1 // loop_body
      %s18 = ssub.s32 %s13, 1
      %s19 = ssub.s32 %s13, 2
      %s26 = sadd.s32 1, %s21
      %p27 = scmp.ge.s32.totalorder %s26, 4
      %s28 = scalar_select %p27, 0, %s26
      %s29 = sadd.s32 1, %s20
      %s30 = scalar_select %p27, %s29, %s20
      %p31 = scmp.ge.s32.totalorder %s30, 1
      %s32 = scalar_select %p31, 0, %s30
      %s33 = ssub.s32 %s20, %s32
      %p34 = scmp.eq.s32.totalorder %s33, 0
      %s36 = sadd.s32 %s35, 1
      %s37 = scalar_select %p34, %s35, %s36
      %p40 = pneg %p34
      %p41 = scmp.eq.s32.totalorder %s13, 3
      %p42 = por %p40, %p41
      %p43 = scmp.ne.s32.totalorder %s35, %s38
      %p44 = scmp.eq.s32.totalorder %s13, 0
      %p45 = por %p43, %p44
      %p46 = scmp.ne.s32.totalorder %s35, %s38
      %p47 = scmp.eq.s32.totalorder %s18, 3
      %p48 = por %p46, %p47
      %p49 = scmp.ne.s32.totalorder %s38, %s39
      %p50 = scmp.eq.s32.totalorder %s18, 0
      %p51 = por %p49, %p50
      %p52 = scmp.ne.s32.totalorder %s38, %s39
      %p53 = scmp.eq.s32.totalorder %s19, 3
      %p54 = por %p52, %p53
      %p56 = scmp.ne.s32.totalorder %s39, %s55
      %p57 = scmp.eq.s32.totalorder %s19, 0
      %p58 = por %p56, %p57
      %s59 = ssub.s32 %s21, %s28
      %p60 = scmp.eq.s32.totalorder %s59, 0
      %s62 = sadd.s32 %s61, 1
      %s63 = scalar_select %p60, %s61, %s62
      %p66 = pneg %p60
      %p67 = scmp.eq.s32.totalorder %s13, 3
      %p68 = por %p66, %p67
      %p69 = scmp.ne.s32.totalorder %s61, %s64
      %p70 = scmp.eq.s32.totalorder %s13, 0
      %p71 = por %p69, %p70
      %p72 = scmp.ne.s32.totalorder %s61, %s64
      %p73 = scmp.eq.s32.totalorder %s18, 3
      %p74 = por %p72, %p73
      %p75 = scmp.ne.s32.totalorder %s64, %s65
      %p76 = scmp.eq.s32.totalorder %s18, 0
      %p77 = por %p75, %p76
      %p78 = scmp.ne.s32.totalorder %s64, %s65
      %p79 = scmp.eq.s32.totalorder %s19, 3
      %p80 = por %p78, %p79
      %p82 = scmp.ne.s32.totalorder %s65, %s81
      %p83 = scmp.eq.s32.totalorder %s19, 0
      %p84 = por %p82, %p83
      %s85 = ssub.s32 %s21, %s28
      %p86 = scmp.eq.s32.totalorder %s85, 0
      %s88 = sadd.s32 %s87, 1
      %s89 = scalar_select %p86, %s87, %s88
      %p92 = pneg %p86
      %p93 = scmp.eq.s32.totalorder %s13, 3
      %p94 = por %p92, %p93
      %p95 = scmp.ne.s32.totalorder %s87, %s90
      %p96 = scmp.eq.s32.totalorder %s13, 0
      %p97 = por %p95, %p96
      %p98 = scmp.ne.s32.totalorder %s87, %s90
      %p99 = scmp.eq.s32.totalorder %s18, 3
      %p100 = por %p98, %p99
      %p101 = scmp.ne.s32.totalorder %s90, %s91
      %p102 = scmp.eq.s32.totalorder %s18, 0
      %p103 = por %p101, %p102
      %p104 = scmp.ne.s32.totalorder %s90, %s91
      %p105 = scmp.eq.s32.totalorder %s19, 3
      %p106 = por %p104, %p105
      %p108 = scmp.ne.s32.totalorder %s91, %s107
      %p109 = scmp.eq.s32.totalorder %s19, 0
      %p110 = por %p108, %p109
      %s111 = ssub.s32 %s20, %s32
      %p112 = scmp.eq.s32.totalorder %s111, 0
      %s114 = sadd.s32 %s113, 1
      %s115 = scalar_select %p112, %s113, %s114
      %p118 = pneg %p112
      %p119 = scmp.eq.s32.totalorder %s13, 3
      %p120 = por %p118, %p119
      %p121 = scmp.ne.s32.totalorder %s113, %s116
      %p122 = scmp.eq.s32.totalorder %s13, 0
      %p123 = por %p121, %p122
      %p124 = scmp.ne.s32.totalorder %s113, %s116
      %p125 = scmp.eq.s32.totalorder %s18, 3
      %p126 = por %p124, %p125
      %p127 = scmp.ne.s32.totalorder %s116, %s117
      %p128 = scmp.eq.s32.totalorder %s18, 0
      %p129 = por %p127, %p128
      %p130 = scmp.ne.s32.totalorder %s116, %s117
      %p131 = scmp.eq.s32.totalorder %s19, 3
      %p132 = por %p130, %p131
      %p134 = scmp.ne.s32.totalorder %s117, %s133
      %p135 = scmp.eq.s32.totalorder %s19, 0
      %p136 = por %p134, %p135
      %s137 = ssub.s32 %s20, %s32
      %p138 = scmp.eq.s32.totalorder %s137, 0
      %s140 = sadd.s32 %s139, 1
      %s141 = scalar_select %p138, %s139, %s140
      %p144 = pneg %p138
      %p145 = scmp.eq.s32.totalorder %s13, 3
      %p146 = por %p144, %p145
      %p147 = scmp.ne.s32.totalorder %s139, %s142
      %p148 = scmp.eq.s32.totalorder %s13, 0
      %p149 = por %p147, %p148
      %p150 = scmp.ne.s32.totalorder %s139, %s142
      %p151 = scmp.eq.s32.totalorder %s18, 3
      %p152 = por %p150, %p151
      %p153 = scmp.ne.s32.totalorder %s142, %s143
      %p154 = scmp.eq.s32.totalorder %s18, 0
      %p155 = por %p153, %p154
      %p156 = scmp.ne.s32.totalorder %s142, %s143
      %p157 = scmp.eq.s32.totalorder %s19, 3
      %p158 = por %p156, %p157
      %p160 = scmp.ne.s32.totalorder %s143, %s159
      %p161 = scmp.eq.s32.totalorder %s19, 0
      %p162 = por %p160, %p161
      %p163 = scmp.le.s32.totalorder 1, %s13
      %p164 = scmp.lt.s32.totalorder %s13, 5
      %p165 = pnand %p163, %p164
      %p166 = pneg %p165
      // Predicated region
      $region9: #{tpu_custom_call.1} parent=5 // pred_check
        _
      $region10: #{tpu_custom_call.1} parent=5 // pred_check_branch
        %168 = sbr.rel (%p165) target = $region12
      $region11: #{tpu_custom_call.1} parent=5 // pred_region
        %s169 = ssub.s32 %s13, 1
        // Predicated region
        $region13: #{tpu_custom_call.1} parent=11 // pred_check
          %p170 = pneg %p51
        $region14: #{tpu_custom_call.1} parent=11 // pred_check_branch
          %172 = sbr.rel (%p170) target = $region16
        $region15: #{tpu_custom_call.1} parent=11 // pred_region
          %s173 = smul.u32 16, %s22
          %p174 = scmp.lt.s32.totalorder %s173, 15
          %s175 = scalar_select %p174, %s173, 15
          %s176 = smul.addr %s175, 4
          %s177 = scalar_lea.vmem %s0, %s176
          %s178 = smul.u32 16, %s22
        $region16: #{tpu_custom_call.1} parent=11 // pred_fallthru
          _
        // Predicated region
        $region17: #{tpu_custom_call.1} parent=11 // pred_check
          %p179 = pneg %p129
        $region18: #{tpu_custom_call.1} parent=11 // pred_check_branch
          %181 = sbr.rel (%p179) target = $region20
        $region19: #{tpu_custom_call.1} parent=11 // pred_region
          %s182 = smul.u32 16, %s22
          %p183 = scmp.lt.s32.totalorder %s182, 15
          %s184 = scalar_select %p183, %s182, 15
          %s185 = smul.addr %s184, 8
          %s186 = scalar_lea.vmem %s3, %s185
          %s187 = smul.u32 16, %s22
        $region20: #{tpu_custom_call.1} parent=11 // pred_fallthru
          _
      $region12: #{tpu_custom_call.1} parent=5 // pred_fallthru
        _
      %p188 = scmp.lt.s32.totalorder %s13, 4
      // Predicated region
      $region21: #{tpu_custom_call.1} parent=5 // pred_check
        %p189 = pneg %p188
      $region22: #{tpu_custom_call.1} parent=5 // pred_check_branch
        %191 = sbr.rel (%p189) target = $region24
      $region23: #{tpu_custom_call.1} parent=5 // pred_region
        // Predicated region
        $region25: #{tpu_custom_call.1} parent=23 // pred_check
          %p192 = pneg %p71
        $region26: #{tpu_custom_call.1} parent=23 // pred_check_branch
          %194 = sbr.rel (%p192) target = $region28
        $region27: #{tpu_custom_call.1} parent=23 // pred_region
          %s195 = sand.u32 %s61, 1
          %s196 = scalar_lea.sflag [#allocation6], %s195
          %s197 = sand.u32 %s61, 1
          %s198 = smul.addr %s197, 128
          %s199 = scalar_lea.vmem [#allocation5], %s198
          %s200 = smul.u32 2, %s21
          %s202 = ssub.s32 2048, 2048
          %203 = vsyncadd %s196, %s202
          %s204 = smul.addr %s200, 64
          %s205 = scalar_lea.hbm %s1, %s204
          %s206 = sshll.u32 %s199, 4
          %s207 = int_to_ptr.vmem [resolvable:$true] %s206
          %212 = dma.hbm_to_vmem [thread:$0]  %s205, 2048, %s207, %s196, 512, 128, 8
        $region28: #{tpu_custom_call.1} parent=23 // pred_fallthru
          _
        // Predicated region
        $region29: #{tpu_custom_call.1} parent=23 // pred_check
          %p213 = pneg %p97
        $region30: #{tpu_custom_call.1} parent=23 // pred_check_branch
          %215 = sbr.rel (%p213) target = $region32
        $region31: #{tpu_custom_call.1} parent=23 // pred_region
          %s216 = smul.u32 2, %s21
          %p217 = scmp.lt.s32.totalorder %s216, 7
          %s218 = scalar_select %p217, %s216, 7
          %s219 = scalar_lea.vmem %s2, %s218
          %s220 = smul.u32 2, %s21
        $region32: #{tpu_custom_call.1} parent=23 // pred_fallthru
          _
      $region24: #{tpu_custom_call.1} parent=5 // pred_fallthru
        _
      %p221 = scmp.le.s32.totalorder 1, %s13
      %p222 = scmp.lt.s32.totalorder %s13, 5
      %p223 = pnand %p221, %p222
      %p224 = pneg %p223
      // Predicated region
      $region33: #{tpu_custom_call.1} parent=5 // pred_check
        _
      $region34: #{tpu_custom_call.1} parent=5 // pred_check_branch
        %226 = sbr.rel (%p223) target = $region36
      $region35: #{tpu_custom_call.1} parent=5 // pred_region
        %s227 = ssub.s32 %s13, 1
        %s228 = sand.u32 %s64, 1
        %s229 = scalar_lea.sflag [#allocation6], %s228
        %s230 = sand.u32 %s64, 1
        %s231 = smul.addr %s230, 128
        %s232 = scalar_lea.vmem [#allocation5], %s231
        // Predicated region
        $region37: #{tpu_custom_call.1} parent=35 // pred_check
          %p233 = pneg %p77
        $region38: #{tpu_custom_call.1} parent=35 // pred_check_branch
          %235 = sbr.rel (%p233) target = $region40
        $region39: #{tpu_custom_call.1} parent=35 // pred_region
          %236 = dma.done %s229, 2048
        $region40: #{tpu_custom_call.1} parent=35 // pred_fallthru
          _
        %s237 = smul.u32 16, %s22
        %p238 = scmp.lt.s32.totalorder %s237, 15
        %s239 = scalar_select %p238, %s237, 15
        %s240 = smul.addr %s239, 4
        %s241 = scalar_lea.vmem %s0, %s240
        %p242 = pneg %p51
        %p243 = pneg %p48
        %s244 = sand.u32 %s64, 1
        %s245 = scalar_lea.sflag [#allocation6], %s244
        %s246 = sand.u32 %s64, 1
        %s247 = smul.addr %s246, 128
        %s248 = scalar_lea.vmem [#allocation5], %s247
        %p249 = pneg %p77
        %p250 = pneg %p74
        %s251 = smul.u32 2, %s23
        %p252 = scmp.lt.s32.totalorder %s251, 7
        %s253 = scalar_select %p252, %s251, 7
        %s254 = scalar_lea.vmem %s2, %s253
        %p255 = pneg %p103
        %p256 = pneg %p100
        %s257 = smul.u32 16, %s22
        %p258 = scmp.lt.s32.totalorder %s257, 15
        %s259 = scalar_select %p258, %s257, 15
        %s260 = smul.addr %s259, 8
        %s261 = scalar_lea.vmem %s3, %s260
        %p262 = pneg %p129
        %p263 = pneg %p126
        %p264 = pneg %p155
        %p265 = pneg %p152
        %s266 = smul.u32 16, %s22
        %p267 = scmp.lt.s32.totalorder %s266, 15
        %s268 = scalar_select %p267, %s266, 15
        %s269 = smul.addr %s268, 8
        %s270 = scalar_lea.vmem %s4, %s269
        %s271 = smul.u32 16, %s22
        %p272 = scmp.lt.s32.totalorder %s271, 15
        %s273 = scalar_select %p272, %s271, 15
        %s274 = smul.addr %s273, 4
        %s275 = scalar_lea.vmem %s0, %s274
        %s276 = smul.u32 16, %s22
        %s277 = smul.u32 2, %s23
        %s278 = smul.u32 2, %s23
        %p279 = scmp.lt.s32.totalorder %s278, 7
        %s280 = scalar_select %p279, %s278, 7
        %s281 = scalar_lea.vmem %s2, %s280
        %s282 = smul.u32 2, %s23
        %s283 = smul.u32 16, %s22
        %p284 = scmp.lt.s32.totalorder %s283, 15
        %s285 = scalar_select %p284, %s283, 15
        %s286 = smul.addr %s285, 8
        %s287 = scalar_lea.vmem %s3, %s286
        %s288 = smul.u32 16, %s22
        %s289 = smul.u32 16, %s22
        %p290 = scmp.lt.s32.totalorder %s289, 15
        %s291 = scalar_select %p290, %s289, 15
        %s292 = smul.addr %s291, 8
        %s293 = scalar_lea.vmem %s4, %s292
        %s294 = smul.u32 16, %s22
        %p296 = scmp.eq.s32.totalorder %s23, 0
        // Predicated region
        $region41: #{tpu_custom_call.1} parent=35 // pred_check
          %p297 = pneg %p296
        $region42: #{tpu_custom_call.1} parent=35 // pred_check_branch
          %299 = sbr.rel (%p297) target = $region44
        $region43: #{tpu_custom_call.1} parent=35 // pred_region
          %vm300 = vcmask 7168
          %301 = vst.msk [vmem:[#allocation2] sm:$0xff] %vm300, -1e+30
          %302 = vst.msk [vmem:[#allocation2 + $0x8] sm:$0xff] %vm300, -1e+30
          %303 = vst.msk [vmem:[#allocation2 + $0x10] sm:$0xff] %vm300, -1e+30
          %304 = vst.msk [vmem:[#allocation2 + $0x18] sm:$0xff] %vm300, -1e+30
          %305 = vst.msk [vmem:[#allocation2 + $0x20] sm:$0xff] %vm300, -1e+30
          %306 = vst.msk [vmem:[#allocation2 + $0x28] sm:$0xff] %vm300, -1e+30
          %307 = vst.msk [vmem:[#allocation2 + $0x30] sm:$0xff] %vm300, -1e+30
          %308 = vst.msk [vmem:[#allocation2 + $0x38] sm:$0xff] %vm300, -1e+30
          %309 = vst.msk [vmem:[#allocation2 + $0x40] sm:$0xff] %vm300, -1e+30
          %310 = vst.msk [vmem:[#allocation2 + $0x48] sm:$0xff] %vm300, -1e+30
          %311 = vst.msk [vmem:[#allocation2 + $0x50] sm:$0xff] %vm300, -1e+30
          %312 = vst.msk [vmem:[#allocation2 + $0x58] sm:$0xff] %vm300, -1e+30
          %313 = vst.msk [vmem:[#allocation2 + $0x60] sm:$0xff] %vm300, -1e+30
          %314 = vst.msk [vmem:[#allocation2 + $0x68] sm:$0xff] %vm300, -1e+30
          %315 = vst.msk [vmem:[#allocation2 + $0x70] sm:$0xff] %vm300, -1e+30
          %316 = vst.msk [vmem:[#allocation2 + $0x78] sm:$0xff] %vm300, -1e+30
          %317 = vst.msk [vmem:[#allocation3] sm:$0xff] %vm300, 0.0
          %318 = vst.msk [vmem:[#allocation3 + $0x8] sm:$0xff] %vm300, 0.0
          %319 = vst.msk [vmem:[#allocation3 + $0x10] sm:$0xff] %vm300, 0.0
          %320 = vst.msk [vmem:[#allocation3 + $0x18] sm:$0xff] %vm300, 0.0
          %321 = vst.msk [vmem:[#allocation3 + $0x20] sm:$0xff] %vm300, 0.0
          %322 = vst.msk [vmem:[#allocation3 + $0x28] sm:$0xff] %vm300, 0.0
          %323 = vst.msk [vmem:[#allocation3 + $0x30] sm:$0xff] %vm300, 0.0
          %324 = vst.msk [vmem:[#allocation3 + $0x38] sm:$0xff] %vm300, 0.0
          %325 = vst.msk [vmem:[#allocation3 + $0x40] sm:$0xff] %vm300, 0.0
          %326 = vst.msk [vmem:[#allocation3 + $0x48] sm:$0xff] %vm300, 0.0
          %327 = vst.msk [vmem:[#allocation3 + $0x50] sm:$0xff] %vm300, 0.0
          %328 = vst.msk [vmem:[#allocation3 + $0x58] sm:$0xff] %vm300, 0.0
          %329 = vst.msk [vmem:[#allocation3 + $0x60] sm:$0xff] %vm300, 0.0
          %330 = vst.msk [vmem:[#allocation3 + $0x68] sm:$0xff] %vm300, 0.0
          %331 = vst.msk [vmem:[#allocation3 + $0x70] sm:$0xff] %vm300, 0.0
          %332 = vst.msk [vmem:[#allocation3 + $0x78] sm:$0xff] %vm300, 0.0
          %333 = vst.msk [vmem:[#allocation4] sm:$0xff] %vm300, 0.0
          %334 = vst.msk [vmem:[#allocation4 + $0x8] sm:$0xff] %vm300, 0.0
          %335 = vst.msk [vmem:[#allocation4 + $0x10] sm:$0xff] %vm300, 0.0
          %336 = vst.msk [vmem:[#allocation4 + $0x18] sm:$0xff] %vm300, 0.0
          %337 = vst.msk [vmem:[#allocation4 + $0x20] sm:$0xff] %vm300, 0.0
          %338 = vst.msk [vmem:[#allocation4 + $0x28] sm:$0xff] %vm300, 0.0
          %339 = vst.msk [vmem:[#allocation4 + $0x30] sm:$0xff] %vm300, 0.0
          %340 = vst.msk [vmem:[#allocation4 + $0x38] sm:$0xff] %vm300, 0.0
          %341 = vst.msk [vmem:[#allocation4 + $0x40] sm:$0xff] %vm300, 0.0
          %342 = vst.msk [vmem:[#allocation4 + $0x48] sm:$0xff] %vm300, 0.0
          %343 = vst.msk [vmem:[#allocation4 + $0x50] sm:$0xff] %vm300, 0.0
          %344 = vst.msk [vmem:[#allocation4 + $0x58] sm:$0xff] %vm300, 0.0
          %345 = vst.msk [vmem:[#allocation4 + $0x60] sm:$0xff] %vm300, 0.0
          %346 = vst.msk [vmem:[#allocation4 + $0x68] sm:$0xff] %vm300, 0.0
          %347 = vst.msk [vmem:[#allocation4 + $0x70] sm:$0xff] %vm300, 0.0
          %348 = vst.msk [vmem:[#allocation4 + $0x78] sm:$0xff] %vm300, 0.0
        $region44: #{tpu_custom_call.1} parent=35 // pred_fallthru
          _
        %v349 = vld [vmem:[%s275] sm:$0xf]
        %v350 = vld [vmem:[%s275 + $0x4] sm:$0xf]
        %v351 = vld [vmem:[%s275 + $0x8] sm:$0xf]
        %v352 = vld [vmem:[%s275 + $0xc] sm:$0xf]
        %v353 = vld [vmem:[%s275 + $0x10] sm:$0xf]
        %v354 = vld [vmem:[%s275 + $0x14] sm:$0xf]
        %v355 = vld [vmem:[%s275 + $0x18] sm:$0xf]
        %v356 = vld [vmem:[%s275 + $0x1c] sm:$0xf]
        %v357 = vld [vmem:[%s275 + $0x20] sm:$0xf]
        %v358 = vld [vmem:[%s275 + $0x24] sm:$0xf]
        %v359 = vld [vmem:[%s275 + $0x28] sm:$0xf]
        %v360 = vld [vmem:[%s275 + $0x2c] sm:$0xf]
        %v361 = vld [vmem:[%s275 + $0x30] sm:$0xf]
        %v362 = vld [vmem:[%s275 + $0x34] sm:$0xf]
        %v363 = vld [vmem:[%s275 + $0x38] sm:$0xf]
        %v364 = vld [vmem:[%s275 + $0x3c] sm:$0xf]
        %v365 = vld [vmem:[%s232] sm:$0xff]
        %v366 = vld [vmem:[%s232 + $0x8] sm:$0xff]
        %v367 = vld [vmem:[%s232 + $0x10] sm:$0xff]
        %v368 = vld [vmem:[%s232 + $0x18] sm:$0xff]
        %v369 = vld [vmem:[%s232 + $0x20] sm:$0xff]
        %v370 = vld [vmem:[%s232 + $0x28] sm:$0xff]
        %v371 = vld [vmem:[%s232 + $0x30] sm:$0xff]
        %v372 = vld [vmem:[%s232 + $0x38] sm:$0xff]
        %v373 = vld [vmem:[%s232 + $0x40] sm:$0xff]
        %v374 = vld [vmem:[%s232 + $0x48] sm:$0xff]
        %v375 = vld [vmem:[%s232 + $0x50] sm:$0xff]
        %v376 = vld [vmem:[%s232 + $0x58] sm:$0xff]
        %v377 = vld [vmem:[%s232 + $0x60] sm:$0xff]
        %v378 = vld [vmem:[%s232 + $0x68] sm:$0xff]
        %v379 = vld [vmem:[%s232 + $0x70] sm:$0xff]
        %v380 = vld [vmem:[%s232 + $0x78] sm:$0xff]
        %v381 = vld [vmem:[%s281] sm:$0x3]
        %v383 = vlaneseq
        %v384 = vshrl.u32 %v383, 7
        %v385 = vsub.s32 0, %v384
        %v386 = vrot.slane %v381, %v385
        %v387 = vlaneseq
        %v388 = vshrl.u32 %v387, 7
        %v389 = vsub.s32 1, %v388
        %v390 = vrot.slane %v381, %v389
        %v409 = vunpack.c.l.b16 %v349
        %v410 = vunpack.c.l.b16 %v350
        %v411 = vunpack.c.l.b16 %v351
        %v412 = vunpack.c.l.b16 %v352
        %v413 = vunpack.c.l.b16 %v353
        %v414 = vunpack.c.l.b16 %v354
        %v415 = vunpack.c.l.b16 %v355
        %v416 = vunpack.c.l.b16 %v356
        %v417 = vunpack.c.l.b16 %v357
        %v418 = vunpack.c.l.b16 %v358
        %v419 = vunpack.c.l.b16 %v359
        %v420 = vunpack.c.l.b16 %v360
        %v421 = vunpack.c.l.b16 %v361
        %v422 = vunpack.c.l.b16 %v362
        %v423 = vunpack.c.l.b16 %v363
        %v424 = vunpack.c.l.b16 %v364
        %v425 = vpack.c.b16 %v410, %v409
        %v426 = vpack.c.b16 %v412, %v411
        %v427 = vpack.c.b16 %v414, %v413
        %v428 = vpack.c.b16 %v416, %v415
        %v429 = vpack.c.b16 %v418, %v417
        %v430 = vpack.c.b16 %v420, %v419
        %v431 = vpack.c.b16 %v422, %v421
        %v432 = vpack.c.b16 %v424, %v423
        %v457 = vunpack.c.l.b16 %v365
        %v458 = vunpack.c.h.b16 %v365
        %v459 = vunpack.c.l.b16 %v366
        %v460 = vunpack.c.h.b16 %v366
        %v461 = vunpack.c.l.b16 %v367
        %v462 = vunpack.c.h.b16 %v367
        %v463 = vunpack.c.l.b16 %v368
        %v464 = vunpack.c.h.b16 %v368
        %v465 = vunpack.c.l.b16 %v369
        %v466 = vunpack.c.h.b16 %v369
        %v467 = vunpack.c.l.b16 %v370
        %v468 = vunpack.c.h.b16 %v370
        %v469 = vunpack.c.l.b16 %v371
        %v470 = vunpack.c.h.b16 %v371
        %v471 = vunpack.c.l.b16 %v372
        %v472 = vunpack.c.h.b16 %v372
        %v473 = vunpack.c.l.b16 %v373
        %v474 = vunpack.c.h.b16 %v373
        %v475 = vunpack.c.l.b16 %v374
        %v476 = vunpack.c.h.b16 %v374
        %v477 = vunpack.c.l.b16 %v375
        %v478 = vunpack.c.h.b16 %v375
        %v479 = vunpack.c.l.b16 %v376
        %v480 = vunpack.c.h.b16 %v376
        %v481 = vunpack.c.l.b16 %v377
        %v482 = vunpack.c.h.b16 %v377
        %v483 = vunpack.c.l.b16 %v378
        %v484 = vunpack.c.h.b16 %v378
        %v485 = vunpack.c.l.b16 %v379
        %v486 = vunpack.c.h.b16 %v379
        %v487 = vunpack.c.l.b16 %v380
        %v488 = vunpack.c.h.b16 %v380
        %v489 = vpack.c.b16 %v459, %v457
        %v490 = vpack.c.b16 %v460, %v458
        %v491 = vpack.c.b16 %v463, %v461
        %v492 = vpack.c.b16 %v464, %v462
        %v493 = vpack.c.b16 %v467, %v465
        %v494 = vpack.c.b16 %v468, %v466
        %v495 = vpack.c.b16 %v471, %v469
        %v496 = vpack.c.b16 %v472, %v470
        %v497 = vpack.c.b16 %v475, %v473
        %v498 = vpack.c.b16 %v476, %v474
        %v499 = vpack.c.b16 %v479, %v477
        %v500 = vpack.c.b16 %v480, %v478
        %v501 = vpack.c.b16 %v483, %v481
        %v502 = vpack.c.b16 %v484, %v482
        %v503 = vpack.c.b16 %v487, %v485
        %v504 = vpack.c.b16 %v488, %v486
        %521 = vmatprep.subr.bf16.mxu0 %v490
        %522 = vmatpush1.bf16.msra.mxu0 %v489
        %523 = vmatprep.subr.bf16.mxu0 %v492
        %524 = vmatpush1.bf16.msra.mxu0 %v491
        %525 = vmatprep.subr.bf16.mxu0 %v494
        %526 = vmatpush1.bf16.msra.mxu0 %v493
        %527 = vmatprep.subr.bf16.mxu0 %v496
        %528 = vmatpush1.bf16.msra.mxu0 %v495
        %529 = vmatprep.subr.bf16.mxu0 %v498
        %530 = vmatpush1.bf16.msra.mxu0 %v497
        %531 = vmatprep.subr.bf16.mxu0 %v500
        %532 = vmatpush1.bf16.msra.mxu0 %v499
        %533 = vmatprep.subr.bf16.mxu0 %v502
        %534 = vmatpush1.bf16.msra.mxu0 %v501
        %535 = vmatprep.subr.bf16.mxu0 %v504
        %536 = vmatpush1.bf16.msra.mxu0 %v503
        %537 = vmatprep.subr.bf16.mxu0 0
        %538 = vmatpush1.bf16.msra.mxu0 0
        %539 = vmatprep.subr.bf16.mxu0 0
        %540 = vmatpush1.bf16.msra.mxu0 0
        %541 = vmatprep.subr.bf16.mxu0 0
        %542 = vmatpush1.bf16.msra.mxu0 0
        %543 = vmatprep.subr.bf16.mxu0 0
        %544 = vmatpush1.bf16.msra.mxu0 0
        %545 = vmatprep.subr.bf16.mxu0 0
        %546 = vmatpush1.bf16.msra.mxu0 0
        %547 = vmatprep.subr.bf16.mxu0 0
        %548 = vmatpush1.bf16.msra.mxu0 0
        %549 = vmatprep.subr.bf16.mxu0 0
        %550 = vmatpush1.bf16.msra.mxu0 0
        %551 = vmatprep.subr.bf16.mxu0 0
        %552 = vmatpush1.bf16.msra.mxu0 0
        %553 = vmatprep.mubr.bf16.mxu0 0
        %554 = vmatmul.mubr.bf16.gmra.mrb[0].mxu0 %v425
        %v555 = vpop.f32.mrb[0].mxu0
        %v556 = vadd.f32 %v386, %v555
        %v557 = vpop.f32.mrb[0].mxu0
        %v558 = vadd.f32 %v390, %v557
        %v559 = vpop.f32.mrb[0].mxu0
        %v560 = vadd.f32 %v386, %v559
        %v561 = vpop.f32.mrb[0].mxu0
        %v562 = vadd.f32 %v390, %v561
        %563 = vmatprep.mubr.bf16.mxu0 0
        %564 = vmatmul.mubr.bf16.gmra.mrb[0].mxu0 %v426
        %v565 = vpop.f32.mrb[0].mxu0
        %v566 = vadd.f32 %v386, %v565
        %v567 = vpop.f32.mrb[0].mxu0
        %v568 = vadd.f32 %v390, %v567
        %v569 = vpop.f32.mrb[0].mxu0
        %v570 = vadd.f32 %v386, %v569
        %v571 = vpop.f32.mrb[0].mxu0
        %v572 = vadd.f32 %v390, %v571
        %573 = vmatprep.mubr.bf16.mxu0 0
        %574 = vmatmul.mubr.bf16.gmra.mrb[0].mxu0 %v427
        %v575 = vpop.f32.mrb[0].mxu0
        %v576 = vadd.f32 %v386, %v575
        %v577 = vpop.f32.mrb[0].mxu0
        %v578 = vadd.f32 %v390, %v577
        %v579 = vpop.f32.mrb[0].mxu0
        %v580 = vadd.f32 %v386, %v579
        %v581 = vpop.f32.mrb[0].mxu0
        %v582 = vadd.f32 %v390, %v581
        %583 = vmatprep.mubr.bf16.mxu0 0
        %584 = vmatmul.mubr.bf16.gmra.mrb[0].mxu0 %v428
        %v585 = vpop.f32.mrb[0].mxu0
        %v586 = vadd.f32 %v386, %v585
        %v587 = vpop.f32.mrb[0].mxu0
        %v588 = vadd.f32 %v390, %v587
        %v589 = vpop.f32.mrb[0].mxu0
        %v590 = vadd.f32 %v386, %v589
        %v591 = vpop.f32.mrb[0].mxu0
        %v592 = vadd.f32 %v390, %v591
        %593 = vmatprep.mubr.bf16.mxu0 0
        %594 = vmatmul.mubr.bf16.gmra.mrb[0].mxu0 %v429
        %v595 = vpop.f32.mrb[0].mxu0
        %v596 = vadd.f32 %v386, %v595
        %v597 = vpop.f32.mrb[0].mxu0
        %v598 = vadd.f32 %v390, %v597
        %v599 = vpop.f32.mrb[0].mxu0
        %v600 = vadd.f32 %v386, %v599
        %v601 = vpop.f32.mrb[0].mxu0
        %v602 = vadd.f32 %v390, %v601
        %603 = vmatprep.mubr.bf16.mxu0 0
        %604 = vmatmul.mubr.bf16.gmra.mrb[0].mxu0 %v430
        %v605 = vpop.f32.mrb[0].mxu0
        %v606 = vadd.f32 %v386, %v605
        %v607 = vpop.f32.mrb[0].mxu0
        %v608 = vadd.f32 %v390, %v607
        %v609 = vpop.f32.mrb[0].mxu0
        %v610 = vadd.f32 %v386, %v609
        %v611 = vpop.f32.mrb[0].mxu0
        %v612 = vadd.f32 %v390, %v611
        %613 = vmatprep.mubr.bf16.mxu0 0
        %614 = vmatmul.mubr.bf16.gmra.mrb[0].mxu0 %v431
        %v615 = vpop.f32.mrb[0].mxu0
        %v616 = vadd.f32 %v386, %v615
        %v617 = vpop.f32.mrb[0].mxu0
        %v618 = vadd.f32 %v390, %v617
        %v619 = vpop.f32.mrb[0].mxu0
        %v620 = vadd.f32 %v386, %v619
        %v621 = vpop.f32.mrb[0].mxu0
        %v622 = vadd.f32 %v390, %v621
        %623 = vmatprep.mubr.bf16.mxu0 0
        %624 = vmatmul.mubr.bf16.gmra.mrb[0].mxu0 %v432
        %v625 = vpop.f32.mrb[0].mxu0
        %v626 = vadd.f32 %v386, %v625
        %v627 = vpop.f32.mrb[0].mxu0
        %v628 = vadd.f32 %v390, %v627
        %v629 = vpop.f32.mrb[0].mxu0
        %v630 = vadd.f32 %v386, %v629
        %v631 = vpop.f32.mrb[0].mxu0
        %v632 = vadd.f32 %v390, %v631
        %633 = vdwg.mxu0
        %v634 = vld [vmem:[#allocation2] sm:$0xff]
        %v635 = vld [vmem:[#allocation2 + $0x8] sm:$0xff]
        %v636 = vld [vmem:[#allocation2 + $0x10] sm:$0xff]
        %v637 = vld [vmem:[#allocation2 + $0x18] sm:$0xff]
        %v638 = vld [vmem:[#allocation2 + $0x20] sm:$0xff]
        %v639 = vld [vmem:[#allocation2 + $0x28] sm:$0xff]
        %v640 = vld [vmem:[#allocation2 + $0x30] sm:$0xff]
        %v641 = vld [vmem:[#allocation2 + $0x38] sm:$0xff]
        %v642 = vld [vmem:[#allocation2 + $0x40] sm:$0xff]
        %v643 = vld [vmem:[#allocation2 + $0x48] sm:$0xff]
        %v644 = vld [vmem:[#allocation2 + $0x50] sm:$0xff]
        %v645 = vld [vmem:[#allocation2 + $0x58] sm:$0xff]
        %v646 = vld [vmem:[#allocation2 + $0x60] sm:$0xff]
        %v647 = vld [vmem:[#allocation2 + $0x68] sm:$0xff]
        %v648 = vld [vmem:[#allocation2 + $0x70] sm:$0xff]
        %v649 = vld [vmem:[#allocation2 + $0x78] sm:$0xff]
        %v650 = vmax.f32 %v556, %v558
        %651 = vmax.xlane.f32.xlu0 %v650
        %v652 = vpop.xlane.xlu0 %651
        %v653 = vmax.f32 %v560, %v562
        %654 = vmax.xlane.f32.xlu0 %v653
        %v655 = vpop.xlane.xlu0 %654
        %v656 = vmax.f32 %v566, %v568
        %657 = vmax.xlane.f32.xlu0 %v656
        %v658 = vpop.xlane.xlu0 %657
        %v659 = vmax.f32 %v570, %v572
        %660 = vmax.xlane.f32.xlu0 %v659
        %v661 = vpop.xlane.xlu0 %660
        %v662 = vmax.f32 %v576, %v578
        %663 = vmax.xlane.f32.xlu0 %v662
        %v664 = vpop.xlane.xlu0 %663
        %v665 = vmax.f32 %v580, %v582
        %666 = vmax.xlane.f32.xlu0 %v665
        %v667 = vpop.xlane.xlu0 %666
        %v668 = vmax.f32 %v586, %v588
        %669 = vmax.xlane.f32.xlu0 %v668
        %v670 = vpop.xlane.xlu0 %669
        %v671 = vmax.f32 %v590, %v592
        %672 = vmax.xlane.f32.xlu0 %v671
        %v673 = vpop.xlane.xlu0 %672
        %v674 = vmax.f32 %v596, %v598
        %675 = vmax.xlane.f32.xlu0 %v674
        %v676 = vpop.xlane.xlu0 %675
        %v677 = vmax.f32 %v600, %v602
        %678 = vmax.xlane.f32.xlu0 %v677
        %v679 = vpop.xlane.xlu0 %678
        %v680 = vmax.f32 %v606, %v608
        %681 = vmax.xlane.f32.xlu0 %v680
        %v682 = vpop.xlane.xlu0 %681
        %v683 = vmax.f32 %v610, %v612
        %684 = vmax.xlane.f32.xlu0 %v683
        %v685 = vpop.xlane.xlu0 %684
        %v686 = vmax.f32 %v616, %v618
        %687 = vmax.xlane.f32.xlu0 %v686
        %v688 = vpop.xlane.xlu0 %687
        %v689 = vmax.f32 %v620, %v622
        %690 = vmax.xlane.f32.xlu0 %v689
        %v691 = vpop.xlane.xlu0 %690
        %v692 = vmax.f32 %v626, %v628
        %693 = vmax.xlane.f32.xlu0 %v692
        %v694 = vpop.xlane.xlu0 %693
        %v695 = vmax.f32 %v630, %v632
        %696 = vmax.xlane.f32.xlu0 %v695
        %v697 = vpop.xlane.xlu0 %696
        %v698 = vmax.f32 %v634, %v652
        %v699 = vmax.f32 %v635, %v655
        %v700 = vmax.f32 %v636, %v658
        %v701 = vmax.f32 %v637, %v661
        %v702 = vmax.f32 %v638, %v664
        %v703 = vmax.f32 %v639, %v667
        %v704 = vmax.f32 %v640, %v670
        %v705 = vmax.f32 %v641, %v673
        %v706 = vmax.f32 %v642, %v676
        %v707 = vmax.f32 %v643, %v679
        %v708 = vmax.f32 %v644, %v682
        %v709 = vmax.f32 %v645, %v685
        %v710 = vmax.f32 %v646, %v688
        %v711 = vmax.f32 %v647, %v691
        %v712 = vmax.f32 %v648, %v694
        %v713 = vmax.f32 %v649, %v697
        %v714 = vsub.f32 %v634, %v698
        %v715 = vsub.f32 %v635, %v699
        %v716 = vsub.f32 %v636, %v700
        %v717 = vsub.f32 %v637, %v701
        %v718 = vsub.f32 %v638, %v702
        %v719 = vsub.f32 %v639, %v703
        %v720 = vsub.f32 %v640, %v704
        %v721 = vsub.f32 %v641, %v705
        %v722 = vsub.f32 %v642, %v706
        %v723 = vsub.f32 %v643, %v707
        %v724 = vsub.f32 %v644, %v708
        %v725 = vsub.f32 %v645, %v709
        %v726 = vsub.f32 %v646, %v710
        %v727 = vsub.f32 %v647, %v711
        %v728 = vsub.f32 %v648, %v712
        %v729 = vsub.f32 %v649, %v713
        %v730 = vmul.f32 %v714, 1.442695
        %v731 = vpow.pop %v730
        %v732 = vmul.f32 %v715, 1.442695
        %v733 = vpow.pop %v732
        %v734 = vmul.f32 %v716, 1.442695
        %v735 = vpow.pop %v734
        %v736 = vmul.f32 %v717, 1.442695
        %v737 = vpow.pop %v736
        %v738 = vmul.f32 %v718, 1.442695
        %v739 = vpow.pop %v738
        %v740 = vmul.f32 %v719, 1.442695
        %v741 = vpow.pop %v740
        %v742 = vmul.f32 %v720, 1.442695
        %v743 = vpow.pop %v742
        %v744 = vmul.f32 %v721, 1.442695
        %v745 = vpow.pop %v744
        %v746 = vmul.f32 %v722, 1.442695
        %v747 = vpow.pop %v746
        %v748 = vmul.f32 %v723, 1.442695
        %v749 = vpow.pop %v748
        %v750 = vmul.f32 %v724, 1.442695
        %v751 = vpow.pop %v750
        %v752 = vmul.f32 %v725, 1.442695
        %v753 = vpow.pop %v752
        %v754 = vmul.f32 %v726, 1.442695
        %v755 = vpow.pop %v754
        %v756 = vmul.f32 %v727, 1.442695
        %v757 = vpow.pop %v756
        %v758 = vmul.f32 %v728, 1.442695
        %v759 = vpow.pop %v758
        %v760 = vmul.f32 %v729, 1.442695
        %v761 = vpow.pop %v760
        %763 = vset.pattern.permute.xlu0 0
        %764 = vperm.xlu0 %763, %v698
        %v765 = vpop.permute.xlu0 %764
        %768 = vset.pattern.permute.xlu0 0
        %769 = vperm.xlu0 %768, %v699
        %v770 = vpop.permute.xlu0 %769
        %773 = vset.pattern.permute.xlu0 0
        %774 = vperm.xlu0 %773, %v700
        %v775 = vpop.permute.xlu0 %774
        %778 = vset.pattern.permute.xlu0 0
        %779 = vperm.xlu0 %778, %v701
        %v780 = vpop.permute.xlu0 %779
        %783 = vset.pattern.permute.xlu0 0
        %784 = vperm.xlu0 %783, %v702
        %v785 = vpop.permute.xlu0 %784
        %788 = vset.pattern.permute.xlu0 0
        %789 = vperm.xlu0 %788, %v703
        %v790 = vpop.permute.xlu0 %789
        %793 = vset.pattern.permute.xlu0 0
        %794 = vperm.xlu0 %793, %v704
        %v795 = vpop.permute.xlu0 %794
        %798 = vset.pattern.permute.xlu0 0
        %799 = vperm.xlu0 %798, %v705
        %v800 = vpop.permute.xlu0 %799
        %803 = vset.pattern.permute.xlu0 0
        %804 = vperm.xlu0 %803, %v706
        %v805 = vpop.permute.xlu0 %804
        %808 = vset.pattern.permute.xlu0 0
        %809 = vperm.xlu0 %808, %v707
        %v810 = vpop.permute.xlu0 %809
        %813 = vset.pattern.permute.xlu0 0
        %814 = vperm.xlu0 %813, %v708
        %v815 = vpop.permute.xlu0 %814
        %818 = vset.pattern.permute.xlu0 0
        %819 = vperm.xlu0 %818, %v709
        %v820 = vpop.permute.xlu0 %819
        %823 = vset.pattern.permute.xlu0 0
        %824 = vperm.xlu0 %823, %v710
        %v825 = vpop.permute.xlu0 %824
        %828 = vset.pattern.permute.xlu0 0
        %829 = vperm.xlu0 %828, %v711
        %v830 = vpop.permute.xlu0 %829
        %833 = vset.pattern.permute.xlu0 0
        %834 = vperm.xlu0 %833, %v712
        %v835 = vpop.permute.xlu0 %834
        %838 = vset.pattern.permute.xlu0 0
        %839 = vperm.xlu0 %838, %v713
        %v840 = vpop.permute.xlu0 %839
        %v842 = vsub.f32 %v556, %v765
        %v843 = vsub.f32 %v558, %v765
        %v844 = vsub.f32 %v560, %v770
        %v845 = vsub.f32 %v562, %v770
        %v846 = vsub.f32 %v566, %v775
        %v847 = vsub.f32 %v568, %v775
        %v848 = vsub.f32 %v570, %v780
        %v849 = vsub.f32 %v572, %v780
        %v850 = vsub.f32 %v576, %v785
        %v851 = vsub.f32 %v578, %v785
        %v852 = vsub.f32 %v580, %v790
        %v853 = vsub.f32 %v582, %v790
        %v854 = vsub.f32 %v586, %v795
        %v855 = vsub.f32 %v588, %v795
        %v856 = vsub.f32 %v590, %v800
        %v857 = vsub.f32 %v592, %v800
        %v858 = vsub.f32 %v596, %v805
        %v859 = vsub.f32 %v598, %v805
        %v860 = vsub.f32 %v600, %v810
        %v861 = vsub.f32 %v602, %v810
        %v862 = vsub.f32 %v606, %v815
        %v863 = vsub.f32 %v608, %v815
        %v864 = vsub.f32 %v610, %v820
        %v865 = vsub.f32 %v612, %v820
        %v866 = vsub.f32 %v616, %v825
        %v867 = vsub.f32 %v618, %v825
        %v868 = vsub.f32 %v620, %v830
        %v869 = vsub.f32 %v622, %v830
        %v870 = vsub.f32 %v626, %v835
        %v871 = vsub.f32 %v628, %v835
        %v872 = vsub.f32 %v630, %v840
        %v873 = vsub.f32 %v632, %v840
        %v874 = vmul.f32 %v842, 1.442695
        %v875 = vpow.pop %v874
        %v876 = vmul.f32 %v843, 1.442695
        %v877 = vpow.pop %v876
        %v878 = vmul.f32 %v844, 1.442695
        %v879 = vpow.pop %v878
        %v880 = vmul.f32 %v845, 1.442695
        %v881 = vpow.pop %v880
        %v882 = vmul.f32 %v846, 1.442695
        %v883 = vpow.pop %v882
        %v884 = vmul.f32 %v847, 1.442695
        %v885 = vpow.pop %v884
        %v886 = vmul.f32 %v848, 1.442695
        %v887 = vpow.pop %v886
        %v888 = vmul.f32 %v849, 1.442695
        %v889 = vpow.pop %v888
        %v890 = vmul.f32 %v850, 1.442695
        %v891 = vpow.pop %v890
        %v892 = vmul.f32 %v851, 1.442695
        %v893 = vpow.pop %v892
        %v894 = vmul.f32 %v852, 1.442695
        %v895 = vpow.pop %v894
        %v896 = vmul.f32 %v853, 1.442695
        %v897 = vpow.pop %v896
        %v898 = vmul.f32 %v854, 1.442695
        %v899 = vpow.pop %v898
        %v900 = vmul.f32 %v855, 1.442695
        %v901 = vpow.pop %v900
        %v902 = vmul.f32 %v856, 1.442695
        %v903 = vpow.pop %v902
        %v904 = vmul.f32 %v857, 1.442695
        %v905 = vpow.pop %v904
        %v906 = vmul.f32 %v858, 1.442695
        %v907 = vpow.pop %v906
        %v908 = vmul.f32 %v859, 1.442695
        %v909 = vpow.pop %v908
        %v910 = vmul.f32 %v860, 1.442695
        %v911 = vpow.pop %v910
        %v912 = vmul.f32 %v861, 1.442695
        %v913 = vpow.pop %v912
        %v914 = vmul.f32 %v862, 1.442695
        %v915 = vpow.pop %v914
        %v916 = vmul.f32 %v863, 1.442695
        %v917 = vpow.pop %v916
        %v918 = vmul.f32 %v864, 1.442695
        %v919 = vpow.pop %v918
        %v920 = vmul.f32 %v865, 1.442695
        %v921 = vpow.pop %v920
        %v922 = vmul.f32 %v866, 1.442695
        %v923 = vpow.pop %v922
        %v924 = vmul.f32 %v867, 1.442695
        %v925 = vpow.pop %v924
        %v926 = vmul.f32 %v868, 1.442695
        %v927 = vpow.pop %v926
        %v928 = vmul.f32 %v869, 1.442695
        %v929 = vpow.pop %v928
        %v930 = vmul.f32 %v870, 1.442695
        %v931 = vpow.pop %v930
        %v932 = vmul.f32 %v871, 1.442695
        %v933 = vpow.pop %v932
        %v934 = vmul.f32 %v872, 1.442695
        %v935 = vpow.pop %v934
        %v936 = vmul.f32 %v873, 1.442695
        %v937 = vpow.pop %v936
        %v938 = vld [vmem:[#allocation3] sm:$0xff]
        %v939 = vld [vmem:[#allocation3 + $0x8] sm:$0xff]
        %v940 = vld [vmem:[#allocation3 + $0x10] sm:$0xff]
        %v941 = vld [vmem:[#allocation3 + $0x18] sm:$0xff]
        %v942 = vld [vmem:[#allocation3 + $0x20] sm:$0xff]
        %v943 = vld [vmem:[#allocation3 + $0x28] sm:$0xff]
        %v944 = vld [vmem:[#allocation3 + $0x30] sm:$0xff]
        %v945 = vld [vmem:[#allocation3 + $0x38] sm:$0xff]
        %v946 = vld [vmem:[#allocation3 + $0x40] sm:$0xff]
        %v947 = vld [vmem:[#allocation3 + $0x48] sm:$0xff]
        %v948 = vld [vmem:[#allocation3 + $0x50] sm:$0xff]
        %v949 = vld [vmem:[#allocation3 + $0x58] sm:$0xff]
        %v950 = vld [vmem:[#allocation3 + $0x60] sm:$0xff]
        %v951 = vld [vmem:[#allocation3 + $0x68] sm:$0xff]
        %v952 = vld [vmem:[#allocation3 + $0x70] sm:$0xff]
        %v953 = vld [vmem:[#allocation3 + $0x78] sm:$0xff]
        %v954 = vmul.f32 %v731, %v938
        %v955 = vmul.f32 %v733, %v939
        %v956 = vmul.f32 %v735, %v940
        %v957 = vmul.f32 %v737, %v941
        %v958 = vmul.f32 %v739, %v942
        %v959 = vmul.f32 %v741, %v943
        %v960 = vmul.f32 %v743, %v944
        %v961 = vmul.f32 %v745, %v945
        %v962 = vmul.f32 %v747, %v946
        %v963 = vmul.f32 %v749, %v947
        %v964 = vmul.f32 %v751, %v948
        %v965 = vmul.f32 %v753, %v949
        %v966 = vmul.f32 %v755, %v950
        %v967 = vmul.f32 %v757, %v951
        %v968 = vmul.f32 %v759, %v952
        %v969 = vmul.f32 %v761, %v953
        %v970 = vadd.f32 %v875, %v877
        %971 = vadd.xlane.f32.xlu0 %v970
        %v972 = vpop.xlane.xlu0 %971
        %v973 = vadd.f32 %v879, %v881
        %974 = vadd.xlane.f32.xlu0 %v973
        %v975 = vpop.xlane.xlu0 %974
        %v976 = vadd.f32 %v883, %v885
        %977 = vadd.xlane.f32.xlu0 %v976
        %v978 = vpop.xlane.xlu0 %977
        %v979 = vadd.f32 %v887, %v889
        %980 = vadd.xlane.f32.xlu0 %v979
        %v981 = vpop.xlane.xlu0 %980
        %v982 = vadd.f32 %v891, %v893
        %983 = vadd.xlane.f32.xlu0 %v982
        %v984 = vpop.xlane.xlu0 %983
        %v985 = vadd.f32 %v895, %v897
        %986 = vadd.xlane.f32.xlu0 %v985
        %v987 = vpop.xlane.xlu0 %986
        %v988 = vadd.f32 %v899, %v901
        %989 = vadd.xlane.f32.xlu0 %v988
        %v990 = vpop.xlane.xlu0 %989
        %v991 = vadd.f32 %v903, %v905
        %992 = vadd.xlane.f32.xlu0 %v991
        %v993 = vpop.xlane.xlu0 %992
        %v994 = vadd.f32 %v907, %v909
        %995 = vadd.xlane.f32.xlu0 %v994
        %v996 = vpop.xlane.xlu0 %995
        %v997 = vadd.f32 %v911, %v913
        %998 = vadd.xlane.f32.xlu0 %v997
        %v999 = vpop.xlane.xlu0 %998
        %v1000 = vadd.f32 %v915, %v917
        %1001 = vadd.xlane.f32.xlu0 %v1000
        %v1002 = vpop.xlane.xlu0 %1001
        %v1003 = vadd.f32 %v919, %v921
        %1004 = vadd.xlane.f32.xlu0 %v1003
        %v1005 = vpop.xlane.xlu0 %1004
        %v1006 = vadd.f32 %v923, %v925
        %1007 = vadd.xlane.f32.xlu0 %v1006
        %v1008 = vpop.xlane.xlu0 %1007
        %v1009 = vadd.f32 %v927, %v929
        %1010 = vadd.xlane.f32.xlu0 %v1009
        %v1011 = vpop.xlane.xlu0 %1010
        %v1012 = vadd.f32 %v931, %v933
        %1013 = vadd.xlane.f32.xlu0 %v1012
        %v1014 = vpop.xlane.xlu0 %1013
        %v1015 = vadd.f32 %v935, %v937
        %1016 = vadd.xlane.f32.xlu0 %v1015
        %v1017 = vpop.xlane.xlu0 %1016
        %v1018 = vadd.f32 %v954, %v972
        %v1019 = vadd.f32 %v955, %v975
        %v1020 = vadd.f32 %v956, %v978
        %v1021 = vadd.f32 %v957, %v981
        %v1022 = vadd.f32 %v958, %v984
        %v1023 = vadd.f32 %v959, %v987
        %v1024 = vadd.f32 %v960, %v990
        %v1025 = vadd.f32 %v961, %v993
        %v1026 = vadd.f32 %v962, %v996
        %v1027 = vadd.f32 %v963, %v999
        %v1028 = vadd.f32 %v964, %v1002
        %v1029 = vadd.f32 %v965, %v1005
        %v1030 = vadd.f32 %v966, %v1008
        %v1031 = vadd.f32 %v967, %v1011
        %v1032 = vadd.f32 %v968, %v1014
        %v1033 = vadd.f32 %v969, %v1017
        %vm1034 = vcmask 7168
        %1035 = vst.msk [vmem:[#allocation3] sm:$0xff] %vm1034, %v1018
        %1036 = vst.msk [vmem:[#allocation3 + $0x8] sm:$0xff] %vm1034, %v1019
        %1037 = vst.msk [vmem:[#allocation3 + $0x10] sm:$0xff] %vm1034, %v1020
        %1038 = vst.msk [vmem:[#allocation3 + $0x18] sm:$0xff] %vm1034, %v1021
        %1039 = vst.msk [vmem:[#allocation3 + $0x20] sm:$0xff] %vm1034, %v1022
        %1040 = vst.msk [vmem:[#allocation3 + $0x28] sm:$0xff] %vm1034, %v1023
        %1041 = vst.msk [vmem:[#allocation3 + $0x30] sm:$0xff] %vm1034, %v1024
        %1042 = vst.msk [vmem:[#allocation3 + $0x38] sm:$0xff] %vm1034, %v1025
        %1043 = vst.msk [vmem:[#allocation3 + $0x40] sm:$0xff] %vm1034, %v1026
        %1044 = vst.msk [vmem:[#allocation3 + $0x48] sm:$0xff] %vm1034, %v1027
        %1045 = vst.msk [vmem:[#allocation3 + $0x50] sm:$0xff] %vm1034, %v1028
        %1046 = vst.msk [vmem:[#allocation3 + $0x58] sm:$0xff] %vm1034, %v1029
        %1047 = vst.msk [vmem:[#allocation3 + $0x60] sm:$0xff] %vm1034, %v1030
        %1048 = vst.msk [vmem:[#allocation3 + $0x68] sm:$0xff] %vm1034, %v1031
        %1049 = vst.msk [vmem:[#allocation3 + $0x70] sm:$0xff] %vm1034, %v1032
        %1050 = vst.msk [vmem:[#allocation3 + $0x78] sm:$0xff] %vm1034, %v1033
        %1051 = vst.msk [vmem:[#allocation2] sm:$0xff] %vm1034, %v698
        %1052 = vst.msk [vmem:[#allocation2 + $0x8] sm:$0xff] %vm1034, %v699
        %1053 = vst.msk [vmem:[#allocation2 + $0x10] sm:$0xff] %vm1034, %v700
        %1054 = vst.msk [vmem:[#allocation2 + $0x18] sm:$0xff] %vm1034, %v701
        %1055 = vst.msk [vmem:[#allocation2 + $0x20] sm:$0xff] %vm1034, %v702
        %1056 = vst.msk [vmem:[#allocation2 + $0x28] sm:$0xff] %vm1034, %v703
        %1057 = vst.msk [vmem:[#allocation2 + $0x30] sm:$0xff] %vm1034, %v704
        %1058 = vst.msk [vmem:[#allocation2 + $0x38] sm:$0xff] %vm1034, %v705
        %1059 = vst.msk [vmem:[#allocation2 + $0x40] sm:$0xff] %vm1034, %v706
        %1060 = vst.msk [vmem:[#allocation2 + $0x48] sm:$0xff] %vm1034, %v707
        %1061 = vst.msk [vmem:[#allocation2 + $0x50] sm:$0xff] %vm1034, %v708
        %1062 = vst.msk [vmem:[#allocation2 + $0x58] sm:$0xff] %vm1034, %v709
        %1063 = vst.msk [vmem:[#allocation2 + $0x60] sm:$0xff] %vm1034, %v710
        %1064 = vst.msk [vmem:[#allocation2 + $0x68] sm:$0xff] %vm1034, %v711
        %1065 = vst.msk [vmem:[#allocation2 + $0x70] sm:$0xff] %vm1034, %v712
        %1066 = vst.msk [vmem:[#allocation2 + $0x78] sm:$0xff] %vm1034, %v713
        %v1067 = vld [vmem:[%s287] sm:$0xff]
        %v1068 = vld [vmem:[%s287 + $0x8] sm:$0xff]
        %v1069 = vld [vmem:[%s287 + $0x10] sm:$0xff]
        %v1070 = vld [vmem:[%s287 + $0x18] sm:$0xff]
        %v1071 = vld [vmem:[%s287 + $0x20] sm:$0xff]
        %v1072 = vld [vmem:[%s287 + $0x28] sm:$0xff]
        %v1073 = vld [vmem:[%s287 + $0x30] sm:$0xff]
        %v1074 = vld [vmem:[%s287 + $0x38] sm:$0xff]
        %v1075 = vld [vmem:[%s287 + $0x40] sm:$0xff]
        %v1076 = vld [vmem:[%s287 + $0x48] sm:$0xff]
        %v1077 = vld [vmem:[%s287 + $0x50] sm:$0xff]
        %v1078 = vld [vmem:[%s287 + $0x58] sm:$0xff]
        %v1079 = vld [vmem:[%s287 + $0x60] sm:$0xff]
        %v1080 = vld [vmem:[%s287 + $0x68] sm:$0xff]
        %v1081 = vld [vmem:[%s287 + $0x70] sm:$0xff]
        %v1082 = vld [vmem:[%s287 + $0x78] sm:$0xff]
        %v1083 = vlaneseq
        %v1084 = vand.u32 %v1083, 127
        %v1085 = vadd.s32 %v1084, 128
        %s1086 = smul.u32 %s23, 256
        %v1087 = vstv %s1086
        %v1088 = vadd.s32 %v1084, %v1087
        %v1089 = vadd.s32 %v1085, %v1087
        %v1090 = vld [vmem:[#allocation4] sm:$0xff]
        %v1091 = vld [vmem:[#allocation4 + $0x8] sm:$0xff]
        %v1092 = vld [vmem:[#allocation4 + $0x10] sm:$0xff]
        %v1093 = vld [vmem:[#allocation4 + $0x18] sm:$0xff]
        %v1094 = vld [vmem:[#allocation4 + $0x20] sm:$0xff]
        %v1095 = vld [vmem:[#allocation4 + $0x28] sm:$0xff]
        %v1096 = vld [vmem:[#allocation4 + $0x30] sm:$0xff]
        %v1097 = vld [vmem:[#allocation4 + $0x38] sm:$0xff]
        %v1098 = vld [vmem:[#allocation4 + $0x40] sm:$0xff]
        %v1099 = vld [vmem:[#allocation4 + $0x48] sm:$0xff]
        %v1100 = vld [vmem:[#allocation4 + $0x50] sm:$0xff]
        %v1101 = vld [vmem:[#allocation4 + $0x58] sm:$0xff]
        %v1102 = vld [vmem:[#allocation4 + $0x60] sm:$0xff]
        %v1103 = vld [vmem:[#allocation4 + $0x68] sm:$0xff]
        %v1104 = vld [vmem:[#allocation4 + $0x70] sm:$0xff]
        %v1105 = vld [vmem:[#allocation4 + $0x78] sm:$0xff]
        %1106 = vset.pattern.permute.xlu0 0
        %1107 = vperm.xlu0 %1106, %v1067
        %v1108 = vpop.permute.xlu0 %1107
        %1109 = vset.pattern.permute.xlu0 0
        %1110 = vperm.xlu0 %1109, %v1068
        %v1111 = vpop.permute.xlu0 %1110
        %1112 = vset.pattern.permute.xlu0 0
        %1113 = vperm.xlu0 %1112, %v1069
        %v1114 = vpop.permute.xlu0 %1113
        %1115 = vset.pattern.permute.xlu0 0
        %1116 = vperm.xlu0 %1115, %v1070
        %v1117 = vpop.permute.xlu0 %1116
        %1118 = vset.pattern.permute.xlu0 0
        %1119 = vperm.xlu0 %1118, %v1071
        %v1120 = vpop.permute.xlu0 %1119
        %1121 = vset.pattern.permute.xlu0 0
        %1122 = vperm.xlu0 %1121, %v1072
        %v1123 = vpop.permute.xlu0 %1122
        %1124 = vset.pattern.permute.xlu0 0
        %1125 = vperm.xlu0 %1124, %v1073
        %v1126 = vpop.permute.xlu0 %1125
        %1127 = vset.pattern.permute.xlu0 0
        %1128 = vperm.xlu0 %1127, %v1074
        %v1129 = vpop.permute.xlu0 %1128
        %1130 = vset.pattern.permute.xlu0 0
        %1131 = vperm.xlu0 %1130, %v1075
        %v1132 = vpop.permute.xlu0 %1131
        %1133 = vset.pattern.permute.xlu0 0
        %1134 = vperm.xlu0 %1133, %v1076
        %v1135 = vpop.permute.xlu0 %1134
        %1136 = vset.pattern.permute.xlu0 0
        %1137 = vperm.xlu0 %1136, %v1077
        %v1138 = vpop.permute.xlu0 %1137
        %1139 = vset.pattern.permute.xlu0 0
        %1140 = vperm.xlu0 %1139, %v1078
        %v1141 = vpop.permute.xlu0 %1140
        %1142 = vset.pattern.permute.xlu0 0
        %1143 = vperm.xlu0 %1142, %v1079
        %v1144 = vpop.permute.xlu0 %1143
        %1145 = vset.pattern.permute.xlu0 0
        %1146 = vperm.xlu0 %1145, %v1080
        %v1147 = vpop.permute.xlu0 %1146
        %1148 = vset.pattern.permute.xlu0 0
        %1149 = vperm.xlu0 %1148, %v1081
        %v1150 = vpop.permute.xlu0 %1149
        %1151 = vset.pattern.permute.xlu0 0
        %1152 = vperm.xlu0 %1151, %v1082
        %v1153 = vpop.permute.xlu0 %1152
        %vm1154 = vcmp.eq.s32.totalorder %v1088, %v1108
        %vm1155 = vcmp.eq.s32.totalorder %v1089, %v1108
        %vm1156 = vcmp.eq.s32.totalorder %v1088, %v1111
        %vm1157 = vcmp.eq.s32.totalorder %v1089, %v1111
        %vm1158 = vcmp.eq.s32.totalorder %v1088, %v1114
        %vm1159 = vcmp.eq.s32.totalorder %v1089, %v1114
        %vm1160 = vcmp.eq.s32.totalorder %v1088, %v1117
        %vm1161 = vcmp.eq.s32.totalorder %v1089, %v1117
        %vm1162 = vcmp.eq.s32.totalorder %v1088, %v1120
        %vm1163 = vcmp.eq.s32.totalorder %v1089, %v1120
        %vm1164 = vcmp.eq.s32.totalorder %v1088, %v1123
        %vm1165 = vcmp.eq.s32.totalorder %v1089, %v1123
        %vm1166 = vcmp.eq.s32.totalorder %v1088, %v1126
        %vm1167 = vcmp.eq.s32.totalorder %v1089, %v1126
        %vm1168 = vcmp.eq.s32.totalorder %v1088, %v1129
        %vm1169 = vcmp.eq.s32.totalorder %v1089, %v1129
        %vm1170 = vcmp.eq.s32.totalorder %v1088, %v1132
        %vm1171 = vcmp.eq.s32.totalorder %v1089, %v1132
        %vm1172 = vcmp.eq.s32.totalorder %v1088, %v1135
        %vm1173 = vcmp.eq.s32.totalorder %v1089, %v1135
        %vm1174 = vcmp.eq.s32.totalorder %v1088, %v1138
        %vm1175 = vcmp.eq.s32.totalorder %v1089, %v1138
        %vm1176 = vcmp.eq.s32.totalorder %v1088, %v1141
        %vm1177 = vcmp.eq.s32.totalorder %v1089, %v1141
        %vm1178 = vcmp.eq.s32.totalorder %v1088, %v1144
        %vm1179 = vcmp.eq.s32.totalorder %v1089, %v1144
        %vm1180 = vcmp.eq.s32.totalorder %v1088, %v1147
        %vm1181 = vcmp.eq.s32.totalorder %v1089, %v1147
        %vm1182 = vcmp.eq.s32.totalorder %v1088, %v1150
        %vm1183 = vcmp.eq.s32.totalorder %v1089, %v1150
        %vm1184 = vcmp.eq.s32.totalorder %v1088, %v1153
        %vm1185 = vcmp.eq.s32.totalorder %v1089, %v1153
        %v1186 = vsel %vm1154, %v556, 0.0
        %v1187 = vsel %vm1155, %v558, 0.0
        %v1188 = vsel %vm1156, %v560, 0.0
        %v1189 = vsel %vm1157, %v562, 0.0
        %v1190 = vsel %vm1158, %v566, 0.0
        %v1191 = vsel %vm1159, %v568, 0.0
        %v1192 = vsel %vm1160, %v570, 0.0
        %v1193 = vsel %vm1161, %v572, 0.0
        %v1194 = vsel %vm1162, %v576, 0.0
        %v1195 = vsel %vm1163, %v578, 0.0
        %v1196 = vsel %vm1164, %v580, 0.0
        %v1197 = vsel %vm1165, %v582, 0.0
        %v1198 = vsel %vm1166, %v586, 0.0
        %v1199 = vsel %vm1167, %v588, 0.0
        %v1200 = vsel %vm1168, %v590, 0.0
        %v1201 = vsel %vm1169, %v592, 0.0
        %v1202 = vsel %vm1170, %v596, 0.0
        %v1203 = vsel %vm1171, %v598, 0.0
        %v1204 = vsel %vm1172, %v600, 0.0
        %v1205 = vsel %vm1173, %v602, 0.0
        %v1206 = vsel %vm1174, %v606, 0.0
        %v1207 = vsel %vm1175, %v608, 0.0
        %v1208 = vsel %vm1176, %v610, 0.0
        %v1209 = vsel %vm1177, %v612, 0.0
        %v1210 = vsel %vm1178, %v616, 0.0
        %v1211 = vsel %vm1179, %v618, 0.0
        %v1212 = vsel %vm1180, %v620, 0.0
        %v1213 = vsel %vm1181, %v622, 0.0
        %v1214 = vsel %vm1182, %v626, 0.0
        %v1215 = vsel %vm1183, %v628, 0.0
        %v1216 = vsel %vm1184, %v630, 0.0
        %v1217 = vsel %vm1185, %v632, 0.0
        %v1218 = vadd.f32 %v1186, %v1187
        %1219 = vadd.xlane.f32.xlu0 %v1218
        %v1220 = vpop.xlane.xlu0 %1219
        %v1221 = vadd.f32 %v1188, %v1189
        %1222 = vadd.xlane.f32.xlu0 %v1221
        %v1223 = vpop.xlane.xlu0 %1222
        %v1224 = vadd.f32 %v1190, %v1191
        %1225 = vadd.xlane.f32.xlu0 %v1224
        %v1226 = vpop.xlane.xlu0 %1225
        %v1227 = vadd.f32 %v1192, %v1193
        %1228 = vadd.xlane.f32.xlu0 %v1227
        %v1229 = vpop.xlane.xlu0 %1228
        %v1230 = vadd.f32 %v1194, %v1195
        %1231 = vadd.xlane.f32.xlu0 %v1230
        %v1232 = vpop.xlane.xlu0 %1231
        %v1233 = vadd.f32 %v1196, %v1197
        %1234 = vadd.xlane.f32.xlu0 %v1233
        %v1235 = vpop.xlane.xlu0 %1234
        %v1236 = vadd.f32 %v1198, %v1199
        %1237 = vadd.xlane.f32.xlu0 %v1236
        %v1238 = vpop.xlane.xlu0 %1237
        %v1239 = vadd.f32 %v1200, %v1201
        %1240 = vadd.xlane.f32.xlu0 %v1239
        %v1241 = vpop.xlane.xlu0 %1240
        %v1242 = vadd.f32 %v1202, %v1203
        %1243 = vadd.xlane.f32.xlu0 %v1242
        %v1244 = vpop.xlane.xlu0 %1243
        %v1245 = vadd.f32 %v1204, %v1205
        %1246 = vadd.xlane.f32.xlu0 %v1245
        %v1247 = vpop.xlane.xlu0 %1246
        %v1248 = vadd.f32 %v1206, %v1207
        %1249 = vadd.xlane.f32.xlu0 %v1248
        %v1250 = vpop.xlane.xlu0 %1249
        %v1251 = vadd.f32 %v1208, %v1209
        %1252 = vadd.xlane.f32.xlu0 %v1251
        %v1253 = vpop.xlane.xlu0 %1252
        %v1254 = vadd.f32 %v1210, %v1211
        %1255 = vadd.xlane.f32.xlu0 %v1254
        %v1256 = vpop.xlane.xlu0 %1255
        %v1257 = vadd.f32 %v1212, %v1213
        %1258 = vadd.xlane.f32.xlu0 %v1257
        %v1259 = vpop.xlane.xlu0 %1258
        %v1260 = vadd.f32 %v1214, %v1215
        %1261 = vadd.xlane.f32.xlu0 %v1260
        %v1262 = vpop.xlane.xlu0 %1261
        %v1263 = vadd.f32 %v1216, %v1217
        %1264 = vadd.xlane.f32.xlu0 %v1263
        %v1265 = vpop.xlane.xlu0 %1264
        %v1266 = vadd.f32 %v1090, %v1220
        %v1267 = vadd.f32 %v1091, %v1223
        %v1268 = vadd.f32 %v1092, %v1226
        %v1269 = vadd.f32 %v1093, %v1229
        %v1270 = vadd.f32 %v1094, %v1232
        %v1271 = vadd.f32 %v1095, %v1235
        %v1272 = vadd.f32 %v1096, %v1238
        %v1273 = vadd.f32 %v1097, %v1241
        %v1274 = vadd.f32 %v1098, %v1244
        %v1275 = vadd.f32 %v1099, %v1247
        %v1276 = vadd.f32 %v1100, %v1250
        %v1277 = vadd.f32 %v1101, %v1253
        %v1278 = vadd.f32 %v1102, %v1256
        %v1279 = vadd.f32 %v1103, %v1259
        %v1280 = vadd.f32 %v1104, %v1262
        %v1281 = vadd.f32 %v1105, %v1265
        %1282 = vst.msk [vmem:[#allocation4] sm:$0xff] %vm1034, %v1266
        %1283 = vst.msk [vmem:[#allocation4 + $0x8] sm:$0xff] %vm1034, %v1267
        %1284 = vst.msk [vmem:[#allocation4 + $0x10] sm:$0xff] %vm1034, %v1268
        %1285 = vst.msk [vmem:[#allocation4 + $0x18] sm:$0xff] %vm1034, %v1269
        %1286 = vst.msk [vmem:[#allocation4 + $0x20] sm:$0xff] %vm1034, %v1270
        %1287 = vst.msk [vmem:[#allocation4 + $0x28] sm:$0xff] %vm1034, %v1271
        %1288 = vst.msk [vmem:[#allocation4 + $0x30] sm:$0xff] %vm1034, %v1272
        %1289 = vst.msk [vmem:[#allocation4 + $0x38] sm:$0xff] %vm1034, %v1273
        %1290 = vst.msk [vmem:[#allocation4 + $0x40] sm:$0xff] %vm1034, %v1274
        %1291 = vst.msk [vmem:[#allocation4 + $0x48] sm:$0xff] %vm1034, %v1275
        %1292 = vst.msk [vmem:[#allocation4 + $0x50] sm:$0xff] %vm1034, %v1276
        %1293 = vst.msk [vmem:[#allocation4 + $0x58] sm:$0xff] %vm1034, %v1277
        %1294 = vst.msk [vmem:[#allocation4 + $0x60] sm:$0xff] %vm1034, %v1278
        %1295 = vst.msk [vmem:[#allocation4 + $0x68] sm:$0xff] %vm1034, %v1279
        %1296 = vst.msk [vmem:[#allocation4 + $0x70] sm:$0xff] %vm1034, %v1280
        %1297 = vst.msk [vmem:[#allocation4 + $0x78] sm:$0xff] %vm1034, %v1281
        %p1298 = scmp.eq.s32.totalorder %s23, 3
        // Predicated region
        $region45: #{tpu_custom_call.1} parent=35 // pred_check
          %p1299 = pneg %p1298
        $region46: #{tpu_custom_call.1} parent=35 // pred_check_branch
          %1301 = sbr.rel (%p1299) target = $region48
        $region47: #{tpu_custom_call.1} parent=35 // pred_region
          %v1302 = vld [vmem:[#allocation2] sm:$0xff]
          %v1303 = vld [vmem:[#allocation2 + $0x8] sm:$0xff]
          %v1304 = vld [vmem:[#allocation2 + $0x10] sm:$0xff]
          %v1305 = vld [vmem:[#allocation2 + $0x18] sm:$0xff]
          %v1306 = vld [vmem:[#allocation2 + $0x20] sm:$0xff]
          %v1307 = vld [vmem:[#allocation2 + $0x28] sm:$0xff]
          %v1308 = vld [vmem:[#allocation2 + $0x30] sm:$0xff]
          %v1309 = vld [vmem:[#allocation2 + $0x38] sm:$0xff]
          %v1310 = vld [vmem:[#allocation2 + $0x40] sm:$0xff]
          %v1311 = vld [vmem:[#allocation2 + $0x48] sm:$0xff]
          %v1312 = vld [vmem:[#allocation2 + $0x50] sm:$0xff]
          %v1313 = vld [vmem:[#allocation2 + $0x58] sm:$0xff]
          %v1314 = vld [vmem:[#allocation2 + $0x60] sm:$0xff]
          %v1315 = vld [vmem:[#allocation2 + $0x68] sm:$0xff]
          %v1316 = vld [vmem:[#allocation2 + $0x70] sm:$0xff]
          %v1317 = vld [vmem:[#allocation2 + $0x78] sm:$0xff]
          %v1318 = vld [vmem:[#allocation3] sm:$0xff]
          %v1319 = vld [vmem:[#allocation3 + $0x8] sm:$0xff]
          %v1320 = vld [vmem:[#allocation3 + $0x10] sm:$0xff]
          %v1321 = vld [vmem:[#allocation3 + $0x18] sm:$0xff]
          %v1322 = vld [vmem:[#allocation3 + $0x20] sm:$0xff]
          %v1323 = vld [vmem:[#allocation3 + $0x28] sm:$0xff]
          %v1324 = vld [vmem:[#allocation3 + $0x30] sm:$0xff]
          %v1325 = vld [vmem:[#allocation3 + $0x38] sm:$0xff]
          %v1326 = vld [vmem:[#allocation3 + $0x40] sm:$0xff]
          %v1327 = vld [vmem:[#allocation3 + $0x48] sm:$0xff]
          %v1328 = vld [vmem:[#allocation3 + $0x50] sm:$0xff]
          %v1329 = vld [vmem:[#allocation3 + $0x58] sm:$0xff]
          %v1330 = vld [vmem:[#allocation3 + $0x60] sm:$0xff]
          %v1331 = vld [vmem:[#allocation3 + $0x68] sm:$0xff]
          %v1332 = vld [vmem:[#allocation3 + $0x70] sm:$0xff]
          %v1333 = vld [vmem:[#allocation3 + $0x78] sm:$0xff]
          %v1334 = vlog2.pop %v1318
          %v1335 = vmul.f32 %v1334, 0.6931472
          %v1336 = vlog2.pop %v1319
          %v1337 = vmul.f32 %v1336, 0.6931472
          %v1338 = vlog2.pop %v1320
          %v1339 = vmul.f32 %v1338, 0.6931472
          %v1340 = vlog2.pop %v1321
          %v1341 = vmul.f32 %v1340, 0.6931472
          %v1342 = vlog2.pop %v1322
          %v1343 = vmul.f32 %v1342, 0.6931472
          %v1344 = vlog2.pop %v1323
          %v1345 = vmul.f32 %v1344, 0.6931472
          %v1346 = vlog2.pop %v1324
          %v1347 = vmul.f32 %v1346, 0.6931472
          %v1348 = vlog2.pop %v1325
          %v1349 = vmul.f32 %v1348, 0.6931472
          %v1350 = vlog2.pop %v1326
          %v1351 = vmul.f32 %v1350, 0.6931472
          %v1352 = vlog2.pop %v1327
          %v1353 = vmul.f32 %v1352, 0.6931472
          %v1354 = vlog2.pop %v1328
          %v1355 = vmul.f32 %v1354, 0.6931472
          %v1356 = vlog2.pop %v1329
          %v1357 = vmul.f32 %v1356, 0.6931472
          %v1358 = vlog2.pop %v1330
          %v1359 = vmul.f32 %v1358, 0.6931472
          %v1360 = vlog2.pop %v1331
          %v1361 = vmul.f32 %v1360, 0.6931472
          %v1362 = vlog2.pop %v1332
          %v1363 = vmul.f32 %v1362, 0.6931472
          %v1364 = vlog2.pop %v1333
          %v1365 = vmul.f32 %v1364, 0.6931472
          %v1366 = vadd.f32 %v1302, %v1335
          %v1367 = vadd.f32 %v1303, %v1337
          %v1368 = vadd.f32 %v1304, %v1339
          %v1369 = vadd.f32 %v1305, %v1341
          %v1370 = vadd.f32 %v1306, %v1343
          %v1371 = vadd.f32 %v1307, %v1345
          %v1372 = vadd.f32 %v1308, %v1347
          %v1373 = vadd.f32 %v1309, %v1349
          %v1374 = vadd.f32 %v1310, %v1351
          %v1375 = vadd.f32 %v1311, %v1353
          %v1376 = vadd.f32 %v1312, %v1355
          %v1377 = vadd.f32 %v1313, %v1357
          %v1378 = vadd.f32 %v1314, %v1359
          %v1379 = vadd.f32 %v1315, %v1361
          %v1380 = vadd.f32 %v1316, %v1363
          %v1381 = vadd.f32 %v1317, %v1365
          %vm1382 = vcmp.ne.s32.totalorder %v1067, 4294967196
          %vm1383 = vcmp.ne.s32.totalorder %v1068, 4294967196
          %vm1384 = vcmp.ne.s32.totalorder %v1069, 4294967196
          %vm1385 = vcmp.ne.s32.totalorder %v1070, 4294967196
          %vm1386 = vcmp.ne.s32.totalorder %v1071, 4294967196
          %vm1387 = vcmp.ne.s32.totalorder %v1072, 4294967196
          %vm1388 = vcmp.ne.s32.totalorder %v1073, 4294967196
          %vm1389 = vcmp.ne.s32.totalorder %v1074, 4294967196
          %vm1390 = vcmp.ne.s32.totalorder %v1075, 4294967196
          %vm1391 = vcmp.ne.s32.totalorder %v1076, 4294967196
          %vm1392 = vcmp.ne.s32.totalorder %v1077, 4294967196
          %vm1393 = vcmp.ne.s32.totalorder %v1078, 4294967196
          %vm1394 = vcmp.ne.s32.totalorder %v1079, 4294967196
          %vm1395 = vcmp.ne.s32.totalorder %v1080, 4294967196
          %vm1396 = vcmp.ne.s32.totalorder %v1081, 4294967196
          %vm1397 = vcmp.ne.s32.totalorder %v1082, 4294967196
          %v1398 = vld [vmem:[#allocation4] sm:$0xff]
          %v1399 = vld [vmem:[#allocation4 + $0x8] sm:$0xff]
          %v1400 = vld [vmem:[#allocation4 + $0x10] sm:$0xff]
          %v1401 = vld [vmem:[#allocation4 + $0x18] sm:$0xff]
          %v1402 = vld [vmem:[#allocation4 + $0x20] sm:$0xff]
          %v1403 = vld [vmem:[#allocation4 + $0x28] sm:$0xff]
          %v1404 = vld [vmem:[#allocation4 + $0x30] sm:$0xff]
          %v1405 = vld [vmem:[#allocation4 + $0x38] sm:$0xff]
          %v1406 = vld [vmem:[#allocation4 + $0x40] sm:$0xff]
          %v1407 = vld [vmem:[#allocation4 + $0x48] sm:$0xff]
          %v1408 = vld [vmem:[#allocation4 + $0x50] sm:$0xff]
          %v1409 = vld [vmem:[#allocation4 + $0x58] sm:$0xff]
          %v1410 = vld [vmem:[#allocation4 + $0x60] sm:$0xff]
          %v1411 = vld [vmem:[#allocation4 + $0x68] sm:$0xff]
          %v1412 = vld [vmem:[#allocation4 + $0x70] sm:$0xff]
          %v1413 = vld [vmem:[#allocation4 + $0x78] sm:$0xff]
          %v1414 = vsub.f32 %v1366, %v1398
          %v1415 = vsub.f32 %v1367, %v1399
          %v1416 = vsub.f32 %v1368, %v1400
          %v1417 = vsub.f32 %v1369, %v1401
          %v1418 = vsub.f32 %v1370, %v1402
          %v1419 = vsub.f32 %v1371, %v1403
          %v1420 = vsub.f32 %v1372, %v1404
          %v1421 = vsub.f32 %v1373, %v1405
          %v1422 = vsub.f32 %v1374, %v1406
          %v1423 = vsub.f32 %v1375, %v1407
          %v1424 = vsub.f32 %v1376, %v1408
          %v1425 = vsub.f32 %v1377, %v1409
          %v1426 = vsub.f32 %v1378, %v1410
          %v1427 = vsub.f32 %v1379, %v1411
          %v1428 = vsub.f32 %v1380, %v1412
          %v1429 = vsub.f32 %v1381, %v1413
          %v1430 = vsel %vm1382, %v1414, 0.0
          %v1431 = vsel %vm1383, %v1415, 0.0
          %v1432 = vsel %vm1384, %v1416, 0.0
          %v1433 = vsel %vm1385, %v1417, 0.0
          %v1434 = vsel %vm1386, %v1418, 0.0
          %v1435 = vsel %vm1387, %v1419, 0.0
          %v1436 = vsel %vm1388, %v1420, 0.0
          %v1437 = vsel %vm1389, %v1421, 0.0
          %v1438 = vsel %vm1390, %v1422, 0.0
          %v1439 = vsel %vm1391, %v1423, 0.0
          %v1440 = vsel %vm1392, %v1424, 0.0
          %v1441 = vsel %vm1393, %v1425, 0.0
          %v1442 = vsel %vm1394, %v1426, 0.0
          %v1443 = vsel %vm1395, %v1427, 0.0
          %v1444 = vsel %vm1396, %v1428, 0.0
          %v1445 = vsel %vm1397, %v1429, 0.0
          %1446 = vst.msk [vmem:[%s293] sm:$0xff] %vm1034, %v1430
          %1447 = vst.msk [vmem:[%s293 + $0x8] sm:$0xff] %vm1034, %v1431
          %1448 = vst.msk [vmem:[%s293 + $0x10] sm:$0xff] %vm1034, %v1432
          %1449 = vst.msk [vmem:[%s293 + $0x18] sm:$0xff] %vm1034, %v1433
          %1450 = vst.msk [vmem:[%s293 + $0x20] sm:$0xff] %vm1034, %v1434
          %1451 = vst.msk [vmem:[%s293 + $0x28] sm:$0xff] %vm1034, %v1435
          %1452 = vst.msk [vmem:[%s293 + $0x30] sm:$0xff] %vm1034, %v1436
          %1453 = vst.msk [vmem:[%s293 + $0x38] sm:$0xff] %vm1034, %v1437
          %1454 = vst.msk [vmem:[%s293 + $0x40] sm:$0xff] %vm1034, %v1438
          %1455 = vst.msk [vmem:[%s293 + $0x48] sm:$0xff] %vm1034, %v1439
          %1456 = vst.msk [vmem:[%s293 + $0x50] sm:$0xff] %vm1034, %v1440
          %1457 = vst.msk [vmem:[%s293 + $0x58] sm:$0xff] %vm1034, %v1441
          %1458 = vst.msk [vmem:[%s293 + $0x60] sm:$0xff] %vm1034, %v1442
          %1459 = vst.msk [vmem:[%s293 + $0x68] sm:$0xff] %vm1034, %v1443
          %1460 = vst.msk [vmem:[%s293 + $0x70] sm:$0xff] %vm1034, %v1444
          %1461 = vst.msk [vmem:[%s293 + $0x78] sm:$0xff] %vm1034, %v1445
        $region48: #{tpu_custom_call.1} parent=35 // pred_fallthru
          _
        %s1462 = smul.u32 16, %s22
        %p1463 = scmp.lt.s32.totalorder %s1462, 15
        %s1464 = scalar_select %p1463, %s1462, 15
        %s1465 = smul.addr %s1464, 8
        %s1466 = scalar_lea.vmem %s4, %s1465
        // Predicated region
        $region49: #{tpu_custom_call.1} parent=35 // pred_check
          %p1467 = pneg %p152
        $region50: #{tpu_custom_call.1} parent=35 // pred_check_branch
          %1469 = sbr.rel (%p1467) target = $region52
        $region51: #{tpu_custom_call.1} parent=35 // pred_region
          %s1470 = smul.u32 16, %s22
        $region52: #{tpu_custom_call.1} parent=35 // pred_fallthru
          _
        // Predicated region
        $region53: #{tpu_custom_call.1} parent=35 // pred_check
          %p1471 = pneg %p152
        $region54: #{tpu_custom_call.1} parent=35 // pred_check_branch
          %1473 = sbr.rel (%p1471) target = $region56
        $region55: #{tpu_custom_call.1} parent=35 // pred_region
          %s1474 = smul.u32 16, %s22
          %p1475 = scmp.lt.s32.totalorder %s1474, 15
          %s1476 = scalar_select %p1475, %s1474, 15
          %s1477 = smul.addr %s1476, 8
          %s1478 = scalar_lea.vmem %s4, %s1477
        $region56: #{tpu_custom_call.1} parent=35 // pred_fallthru
          _
      $region36: #{tpu_custom_call.1} parent=5 // pred_fallthru
        _
      %p1479 = scmp.le.s32.totalorder 2, %s13
      // Predicated region
      $region57: #{tpu_custom_call.1} parent=5 // pred_check
        %p1480 = pneg %p1479
      $region58: #{tpu_custom_call.1} parent=5 // pred_check_branch
        %1482 = sbr.rel (%p1480) target = $region60
      $region59: #{tpu_custom_call.1} parent=5 // pred_region
        %s1483 = ssub.s32 %s13, 2
      $region60: #{tpu_custom_call.1} parent=5 // pred_fallthru
        _
    $region6: #{tpu_custom_call.1} parent=1 // loop_footer
      %s17 = sadd.s32 1, %s13
    $region7: #{tpu_custom_call.1} parent=1 // loop_footer_branch
      %12 = sbr.rel target = $region3
    $region8: #{tpu_custom_call.1} parent=1 // loop_exit
      _
    %1484 = vsyncpa [#allocation6], 1
    %s1485 = scalar_lea.sflag [#allocation6], 1
    %1486 = vsyncpa %s1485, 1

</llo_original>
